<compile_context>
chip_gen: v7x
topology: tpu7x:2x2x1
jax: 0.10.0
libtpu: 0.0.40
codegen_flags: <defaults>
</compile_context>

<pallas_src>
import functools

import jax
import jax.numpy as jnp
from jax.experimental import pallas as pl
from jax.experimental.pallas import tpu as pltpu

HIDDEN = 400       # fixed by the module definition
HIDDEN_PAD = 512   # padded hidden width (clean vregs / MXU tiles; exact for Linear+ReLU)
LANE = 128


def _round_up(n, m):
    return ((n + m - 1) // m) * m


def enc_kernel(x_ref, w1_ref, b1_ref, w2_ref, b2_ref, w3_ref, b3_ref, out_ref):
    # Layer 1: Linear(input_dim_pad, 512) + ReLU (bf16 operands, f32 accumulate)
    h1 = jnp.dot(x_ref[...], w1_ref[...], preferred_element_type=jnp.float32)
    h1 = jnp.maximum(h1 + b1_ref[...], 0.0)                      # f32 elementwise
    # Layer 2: Linear(512, 512) + ReLU
    h2 = jnp.dot(h1.astype(jnp.bfloat16), w2_ref[...],
                 preferred_element_type=jnp.float32)
    h2 = jnp.maximum(h2 + b2_ref[...], 0.0)                      # f32 elementwise
    # Layer 3: fused mu|logvar head -> single lane-dense (TB, 128) store
    h3 = jnp.dot(h2.astype(jnp.bfloat16), w3_ref[...],
                 preferred_element_type=jnp.float32)
    out_ref[...] = (h3 + b3_ref[...]).astype(out_ref.dtype)


def prepare_params(params, input_dim):
    """One-time padding + bf16 cast of Enc params.

    Call this when the parameters change (e.g. once per training step / once at
    load time for inference), NOT on every forward call.
    """
    w1, b1, w2, b2, w3, b3 = params
    # Defensive: accept 1-D PyTorch-style biases or (1, n) row vectors.
    b1 = jnp.reshape(b1, (1, -1)).astype(jnp.float32)
    b2 = jnp.reshape(b2, (1, -1)).astype(jnp.float32)
    b3 = jnp.reshape(b3, (1, -1)).astype(jnp.float32)
    latent_dim = w3.shape[1] // 2

    H = HIDDEN_PAD
    Ip = _round_up(max(input_dim, LANE), LANE)          # lane-clean K for layer 1
    Op = _round_up(max(2 * latent_dim, LANE), LANE)     # lane-dense fused output head

    w1p = jnp.zeros((Ip, H), jnp.float32).at[:input_dim, :HIDDEN].set(w1)
    b1p = jnp.zeros((1, H), jnp.float32).at[:, :HIDDEN].set(b1)
    w2p = jnp.zeros((H, H), jnp.float32).at[:HIDDEN, :HIDDEN].set(w2)
    b2p = jnp.zeros((1, H), jnp.float32).at[:, :HIDDEN].set(b2)
    w3p = jnp.zeros((H, Op), jnp.float32).at[:HIDDEN, :2 * latent_dim].set(w3)
    b3p = jnp.zeros((1, Op), jnp.float32).at[:, :2 * latent_dim].set(b3)

    arrays = (w1p.astype(jnp.bfloat16), b1p,
              w2p.astype(jnp.bfloat16), b2p,
              w3p.astype(jnp.bfloat16), b3p)
    arrays = jax.device_put(arrays)
    return {"arrays": arrays, "latent_dim": latent_dim, "input_dim": input_dim}


@functools.partial(jax.jit, static_argnames=("latent_dim", "tb_max"))
def _enc_forward(x, w1, b1, w2, b2, w3, b3, *, latent_dim, tb_max):
    B, input_dim = x.shape
    Ip, H = w1.shape
    Op = w3.shape[1]

    # --- pad x columns to the padded input width; bf16 matmul operand --------
    xb = x.astype(jnp.bfloat16)
    if Ip != input_dim:
        xb = jnp.pad(xb, ((0, 0), (0, Ip - input_dim)))

    # --- batch tiling: multiple of 8 sublanes; >= 2 grid steps for large B so
    #     the "parallel" axis feeds both v7x TensorCores ----------------------
    if B >= 128:
        TB = min(tb_max, _round_up((B + 1) // 2, 8))
    else:
        TB = min(tb_max, _round_up(max(B, 8), 8))
    Bp = _round_up(B, TB)
    if Bp != B:
        xb = jnp.pad(xb, ((0, Bp - B), (0, 0)))
    grid = (Bp // TB,)

    # Weights/biases use a constant block index -> fetched once, stay resident
    # in VMEM while x/out tiles pipeline over the batch grid.
    const = lambda i: (0, 0)
    in_specs = [
        pl.BlockSpec((TB, Ip), lambda i: (i, 0)),   # x tile
        pl.BlockSpec((Ip, H), const),               # w1
        pl.BlockSpec((1, H), const),                # b1
        pl.BlockSpec((H, H), const),                # w2
        pl.BlockSpec((1, H), const),                # b2
        pl.BlockSpec((H, Op), const),               # w3 (fused mu|logvar head)
        pl.BlockSpec((1, Op), const),               # b3 (fused)
    ]
    out_specs = pl.BlockSpec((TB, Op), lambda i: (i, 0))

    flops = 2 * Bp * (Ip * H + H * H + H * Op)
    weight_bytes = 2 * (Ip * H + H * H + H * Op)          # bf16 weights
    bias_bytes = 4 * (2 * H + Op)                          # f32 biases
    io_bytes = 2 * Bp * Ip + 4 * Bp * Op                   # bf16 in, f32 out
    cost = pl.CostEstimate(flops=flops, transcendentals=0,
                           bytes_accessed=weight_bytes + bias_bytes + io_bytes)

    out = pl.pallas_call(
        enc_kernel,
        out_shape=jax.ShapeDtypeStruct((Bp, Op), jnp.float32),
        grid_spec=pltpu.PrefetchScalarGridSpec(
            num_scalar_prefetch=0,
            grid=grid,
            in_specs=in_specs,
            out_specs=out_specs,
        ),
        compiler_params=pltpu.CompilerParams(
            dimension_semantics=("parallel",),
            # Above v5e's 16 MiB default scoped limit; actual usage at
            # tb_max=1024 is ~15 MB, well inside v7x's 64 MiB physical VMEM.
            vmem_limit_bytes=64 * 1024 * 1024,
        ),
        cost_estimate=cost,
    )(xb, w1, b1, w2, b2, w3, b3)

    # Slice the fused head in the wrapper (fused into the same jit, lane slice
    # happens on the XLA side, not inside the kernel store path).
    mu = out[:B, :latent_dim]
    logvar = out[:B, latent_dim:2 * latent_dim]
    return mu, logvar


def enc_forward(x, prep, *, tb_max=1024):
    """Pallas forward of Enc. x: [B, input_dim] float32 -> (mu, logvar)."""
    w1, b1, w2, b2, w3, b3 = prep["arrays"]
    return _enc_forward(x, w1, b1, w2, b2, w3, b3,
                        latent_dim=prep["latent_dim"], tb_max=tb_max)


def init_params(key, input_dim, latent_dim):
    """Deterministic synthetic parameter init (PyTorch Linear-style uniform)."""
    ks = jax.random.split(key, 6)

    def lin(kw, kb, fan_in, fan_out):
        bound = 1.0 / jnp.sqrt(fan_in)
        w = jax.random.uniform(kw, (fan_in, fan_out), jnp.float32, -bound, bound)
        b = jax.random.uniform(kb, (fan_out,), jnp.float32, -bound, bound)
        return w, b

    w1, b1 = lin(ks[0], ks[1], input_dim, HIDDEN)
    w2, b2 = lin(ks[2], ks[3], HIDDEN, HIDDEN)
    w3, b3 = lin(ks[4], ks[5], HIDDEN, 2 * latent_dim)
    return (w1, b1, w2, b2, w3, b3)


def enc_reference(x, params):
    """Pure-JAX f32 reference for correctness checking."""
    w1, b1, w2, b2, w3, b3 = params
    h = jnp.maximum(x @ w1 + b1, 0.0)
    h = jnp.maximum(h @ w2 + b2, 0.0)
    h = h @ w3 + b3
    half = h.shape[1] // 2
    return h[:, :half], h[:, half:]


if __name__ == "__main__":
    key = jax.random.PRNGKey(0)
    k_x, k_p = jax.random.split(key)

    batch, input_dim, latent_dim = 8, 64, 8
    x = jax.random.normal(k_x, (batch, input_dim), dtype=jnp.float32)
    params = init_params(k_p, input_dim, latent_dim)

    prep = prepare_params(params, input_dim)   # one-time pad + bf16 cast
    mu, logvar = enc_forward(x, prep)
    jax.block_until_ready((mu, logvar))

    mu_ref, logvar_ref = enc_reference(x, params)
    assert mu.shape == (batch, latent_dim)
    assert logvar.shape == (batch, latent_dim)
    # bf16 matmul operands (f32 accumulate) -> loosened tolerance vs f32 ref.
    assert jnp.allclose(mu, mu_ref, atol=5e-2, rtol=5e-2)
    assert jnp.allclose(logvar, logvar_ref, atol=5e-2, rtol=5e-2)

    print("KERNEL_OK")
</pallas_src>

<mosaic_0001>
module attributes {stable_mosaic.version = 11 : i64} {
  func.func @enc_kernel(%arg0: i32, %arg1: memref<8x128xbf16, #tpu.memory_space<vmem>>, %arg2: memref<128x512xbf16, #tpu.memory_space<vmem>>, %arg3: memref<1x512xf32, #tpu.memory_space<vmem>>, %arg4: memref<512x512xbf16, #tpu.memory_space<vmem>>, %arg5: memref<1x512xf32, #tpu.memory_space<vmem>>, %arg6: memref<512x128xbf16, #tpu.memory_space<vmem>>, %arg7: memref<1x128xf32, #tpu.memory_space<vmem>>, %arg8: memref<8x128xf32, #tpu.memory_space<vmem>>) attributes {dimension_semantics = [#tpu.dimension_semantics<parallel>], iteration_bounds = array<i64: 1>, scalar_prefetch = 0 : i64, scratch_operands = 0 : i64, tpu.core_type = #tpu.core_type<tc>, window_params = [{transform_indices = @transform_0, window_bounds = array<i64: 8, 128>}, {pipeline_mode = #tpu.pipeline_mode<synchronous>, transform_indices = @transform_1, window_bounds = array<i64: 128, 512>}, {pipeline_mode = #tpu.pipeline_mode<synchronous>, transform_indices = @transform_2, window_bounds = array<i64: 1, 512>}, {pipeline_mode = #tpu.pipeline_mode<synchronous>, transform_indices = @transform_3, window_bounds = array<i64: 512, 512>}, {pipeline_mode = #tpu.pipeline_mode<synchronous>, transform_indices = @transform_4, window_bounds = array<i64: 1, 512>}, {pipeline_mode = #tpu.pipeline_mode<synchronous>, transform_indices = @transform_5, window_bounds = array<i64: 512, 128>}, {pipeline_mode = #tpu.pipeline_mode<synchronous>, transform_indices = @transform_6, window_bounds = array<i64: 1, 128>}, {transform_indices = @transform_7, window_bounds = array<i64: 8, 128>}]} {
    %c0 = arith.constant 0 : index
    %c0_0 = arith.constant 0 : index
    %0 = vector.load %arg1[%c0, %c0_0] : memref<8x128xbf16, #tpu.memory_space<vmem>>, vector<8x128xbf16>
    %c0_1 = arith.constant 0 : index
    %c0_2 = arith.constant 0 : index
    %1 = vector.load %arg2[%c0_1, %c0_2] : memref<128x512xbf16, #tpu.memory_space<vmem>>, vector<128x512xbf16>
    %cst = arith.constant dense<0.000000e+00> : vector<8x512xf32>
    %2 = tpu.matmul %0, %1, %cst {dimension_numbers = #tpu.dot_dimension_numbers<[1], [0], [0], [1], [0, 0, 1, 1], [], []>} : vector<8x128xbf16>, vector<128x512xbf16>, vector<8x512xf32> -> vector<8x512xf32>
    %c0_3 = arith.constant 0 : index
    %c0_4 = arith.constant 0 : index
    %3 = vector.load %arg3[%c0_3, %c0_4] : memref<1x512xf32, #tpu.memory_space<vmem>>, vector<1x512xf32>
    %4 = vector.broadcast %3 : vector<1x512xf32> to vector<8x512xf32>
    %5 = arith.addf %2, %4 : vector<8x512xf32>
    %cst_5 = arith.constant 0.000000e+00 : f32
    %6 = vector.broadcast %cst_5 : f32 to vector<8x512xf32>
    %7 = arith.maximumf %5, %6 : vector<8x512xf32>
    %8 = arith.truncf %7 : vector<8x512xf32> to vector<8x512xbf16>
    %c0_6 = arith.constant 0 : index
    %c0_7 = arith.constant 0 : index
    %9 = vector.load %arg4[%c0_6, %c0_7] : memref<512x512xbf16, #tpu.memory_space<vmem>>, vector<512x512xbf16>
    %cst_8 = arith.constant dense<0.000000e+00> : vector<8x512xf32>
    %10 = tpu.matmul %8, %9, %cst_8 {dimension_numbers = #tpu.dot_dimension_numbers<[1], [0], [0], [1], [0, 0, 1, 1], [], []>} : vector<8x512xbf16>, vector<512x512xbf16>, vector<8x512xf32> -> vector<8x512xf32>
    %c0_9 = arith.constant 0 : index
    %c0_10 = arith.constant 0 : index
    %11 = vector.load %arg5[%c0_9, %c0_10] : memref<1x512xf32, #tpu.memory_space<vmem>>, vector<1x512xf32>
    %12 = vector.broadcast %11 : vector<1x512xf32> to vector<8x512xf32>
    %13 = arith.addf %10, %12 : vector<8x512xf32>
    %cst_11 = arith.constant 0.000000e+00 : f32
    %14 = vector.broadcast %cst_11 : f32 to vector<8x512xf32>
    %15 = arith.maximumf %13, %14 : vector<8x512xf32>
    %16 = arith.truncf %15 : vector<8x512xf32> to vector<8x512xbf16>
    %c0_12 = arith.constant 0 : index
    %c0_13 = arith.constant 0 : index
    %17 = vector.load %arg6[%c0_12, %c0_13] : memref<512x128xbf16, #tpu.memory_space<vmem>>, vector<512x128xbf16>
    %cst_14 = arith.constant dense<0.000000e+00> : vector<8x128xf32>
    %18 = tpu.matmul %16, %17, %cst_14 {dimension_numbers = #tpu.dot_dimension_numbers<[1], [0], [0], [1], [0, 0, 1, 1], [], []>} : vector<8x512xbf16>, vector<512x128xbf16>, vector<8x128xf32> -> vector<8x128xf32>
    %c0_15 = arith.constant 0 : index
    %c0_16 = arith.constant 0 : index
    %19 = vector.load %arg7[%c0_15, %c0_16] : memref<1x128xf32, #tpu.memory_space<vmem>>, vector<1x128xf32>
    %20 = vector.broadcast %19 : vector<1x128xf32> to vector<8x128xf32>
    %21 = arith.addf %18, %20 : vector<8x128xf32>
    %c0_17 = arith.constant 0 : index
    %c0_18 = arith.constant 0 : index
    %22 = vector.load %arg8[%c0_17, %c0_18] : memref<8x128xf32, #tpu.memory_space<vmem>>, vector<8x128xf32>
    tpu.vector_store %arg8[%c0_17, %c0_18], %21 {strides = array<i32>} : memref<8x128xf32, #tpu.memory_space<vmem>>, vector<8x128xf32>,
    return
  }
  func.func @transform_0(%arg0: i32) -> (i32, i32) {
    %c0_i32 = arith.constant 0 : i32
    %c0_i32_0 = arith.constant 0 : i32
    return %arg0, %c0_i32 : i32, i32
  }
  func.func @transform_1(%arg0: i32) -> (i32, i32) {
    %c0_i32 = arith.constant 0 : i32
    %c0_i32_0 = arith.constant 0 : i32
    %c0_i32_1 = arith.constant 0 : i32
    return %c0_i32, %c0_i32_0 : i32, i32
  }
  func.func @transform_2(%arg0: i32) -> (i32, i32) {
    %c0_i32 = arith.constant 0 : i32
    %c0_i32_0 = arith.constant 0 : i32
    %c0_i32_1 = arith.constant 0 : i32
    return %c0_i32, %c0_i32_0 : i32, i32
  }
  func.func @transform_3(%arg0: i32) -> (i32, i32) {
    %c0_i32 = arith.constant 0 : i32
    %c0_i32_0 = arith.constant 0 : i32
    %c0_i32_1 = arith.constant 0 : i32
    return %c0_i32, %c0_i32_0 : i32, i32
  }
  func.func @transform_4(%arg0: i32) -> (i32, i32) {
    %c0_i32 = arith.constant 0 : i32
    %c0_i32_0 = arith.constant 0 : i32
    %c0_i32_1 = arith.constant 0 : i32
    return %c0_i32, %c0_i32_0 : i32, i32
  }
  func.func @transform_5(%arg0: i32) -> (i32, i32) {
    %c0_i32 = arith.constant 0 : i32
    %c0_i32_0 = arith.constant 0 : i32
    %c0_i32_1 = arith.constant 0 : i32
    return %c0_i32, %c0_i32_0 : i32, i32
  }
  func.func @transform_6(%arg0: i32) -> (i32, i32) {
    %c0_i32 = arith.constant 0 : i32
    %c0_i32_0 = arith.constant 0 : i32
    %c0_i32_1 = arith.constant 0 : i32
    return %c0_i32, %c0_i32_0 : i32, i32
  }
  func.func @transform_7(%arg0: i32) -> (i32, i32) {
    %c0_i32 = arith.constant 0 : i32
    %c0_i32_0 = arith.constant 0 : i32
    return %arg0, %c0_i32 : i32, i32
  }
}

</mosaic_0001>

<llo_original>
// kernel: _enc_forward.1
$region0: #{_enc_forward.1}
  #allocation0 [shape = 'u32[]', space=smem, size = 0x4, offset = 0x4, fixed_abs, tag = 'smem constant byte address 0x4 - core index']
  #allocation1 [shape = 'u32[144,128]{1,0:T(1,128)}', space=vmem, size = 0x12000, scoped, tag = 'internal scratch']
  %s0 = inlined_call_operand.hbm [shape: bf16[8,128], index: 0, kind: input, shape index: {}]
  %s1 = inlined_call_operand.hbm [shape: bf16[128,512], index: 1, kind: input, shape index: {}]
  %s2 = inlined_call_operand.hbm [shape: f32[1,512], index: 2, kind: input, shape index: {}]
  %s3 = inlined_call_operand.hbm [shape: bf16[512,512], index: 3, kind: input, shape index: {}]
  %s4 = inlined_call_operand.hbm [shape: f32[1,512], index: 4, kind: input, shape index: {}]
  %s5 = inlined_call_operand.hbm [shape: bf16[512,128], index: 5, kind: input, shape index: {}]
  %s6 = inlined_call_operand.hbm [shape: f32[1,128], index: 6, kind: input, shape index: {}]
  %s7 = inlined_call_operand.hbm [shape: f32[8,128], index: 7, kind: output, shape index: {}]
  %s8 = sld [smem:[#allocation0]]
  $region66: #{_enc_forward.1} parent=0
    _
  %s10 = ssub.s32 1, %s8
  %s11 = scalar_select 0, %s10, %s8
  $region1: #{_enc_forward.1} parent=0
    #allocation2 [shape = 'u8[2048]{0}', space=vmem, size = 0x800, scoped, tag = 'input window, operand 0, single buffered']
    #allocation3 [shape = 's32[1]{0}', space=sflag, size = 0x4, scoped, tag = 'scoped memory for _enc_forward.1']
    #allocation4 [shape = 's32[1]{0}', space=sflag, size = 0x4, scoped, tag = 'scoped memory for _enc_forward.1']
    #allocation5 [shape = 'u8[131072]{0}', space=vmem, size = 0x20000, scoped, tag = 'input window, operand 1, single buffered']
    #allocation6 [shape = 's32[1]{0}', space=sflag, size = 0x4, scoped, tag = 'scoped memory for _enc_forward.1']
    #allocation7 [shape = 'u8[2048]{0}', space=vmem, size = 0x800, scoped, tag = 'input window, operand 2, single buffered']
    #allocation8 [shape = 'u8[524288]{0}', space=vmem, size = 0x80000, scoped, tag = 'input window, operand 3, single buffered']
    #allocation9 [shape = 's32[1]{0}', space=sflag, size = 0x4, scoped, tag = 'scoped memory for _enc_forward.1']
    #allocation10 [shape = 'u8[2048]{0}', space=vmem, size = 0x800, scoped, tag = 'input window, operand 4, single buffered']
    #allocation11 [shape = 'u8[131072]{0}', space=vmem, size = 0x20000, scoped, tag = 'input window, operand 5, single buffered']
    #allocation12 [shape = 's32[1]{0}', space=sflag, size = 0x4, scoped, tag = 'scoped memory for _enc_forward.1']
    #allocation13 [shape = 'u8[512]{0}', space=vmem, size = 0x400, scoped, tag = 'input window, operand 6, single buffered']
    #allocation14 [shape = 'u8[4096]{0}', space=vmem, size = 0x1000, scoped, tag = 'output window, operand 0, single buffered']
    %12 = vsyncpa [#allocation3], 0
    %13 = vsyncpa [#allocation6], 0
    %14 = vsyncpa [#allocation9], 0
    %15 = vsyncpa [#allocation12], 0
    %16 = vsyncpa [#allocation4], 0
    // Predicated region
    $region2: #{_enc_forward.1} parent=1 // pred_check
      _
    $region3: #{_enc_forward.1} parent=1 // pred_check_branch
      %18 = sbr.rel (0) target = $region5
    $region4: #{_enc_forward.1} parent=1 // pred_region
      %s20 = ssub.s32 64, 64
      %21 = vsyncadd [#allocation3], %s20
      %s23 = sshll.u32 [#allocation2], 4
      %s24 = int_to_ptr.vmem [resolvable:$true] %s23
      %26 = dma.hbm_to_vmem [thread:$0]  %s0, 64, %s24, [#allocation3]
    $region5: #{_enc_forward.1} parent=1 // pred_fallthru
      _
    // Predicated region
    $region6: #{_enc_forward.1} parent=1 // pred_check
      _
    $region7: #{_enc_forward.1} parent=1 // pred_check_branch
      %28 = sbr.rel (0) target = $region9
    $region8: #{_enc_forward.1} parent=1 // pred_region
      %s30 = ssub.s32 4096, 4096
      %31 = vsyncadd [#allocation6], %s30
      %s32 = sshll.u32 [#allocation5], 4
      %s33 = int_to_ptr.vmem [resolvable:$true] %s32
      %38 = dma.hbm_to_vmem [thread:$0]  %s1, 4096, %s33, [#allocation6], 256, 256, 16
    $region9: #{_enc_forward.1} parent=1 // pred_fallthru
      _
    // Predicated region
    $region10: #{_enc_forward.1} parent=1 // pred_check
      _
    $region11: #{_enc_forward.1} parent=1 // pred_check_branch
      %40 = sbr.rel (0) target = $region13
    $region12: #{_enc_forward.1} parent=1 // pred_region
      %s42 = ssub.s32 64, 64
      %43 = vsyncadd [#allocation6], %s42
      %s45 = sshll.u32 [#allocation7], 4
      %s46 = int_to_ptr.vmem [resolvable:$true] %s45
      %48 = dma.hbm_to_vmem [thread:$0]  %s2, 64, %s46, [#allocation6]
    $region13: #{_enc_forward.1} parent=1 // pred_fallthru
      _
    // Predicated region
    $region14: #{_enc_forward.1} parent=1 // pred_check
      _
    $region15: #{_enc_forward.1} parent=1 // pred_check_branch
      %50 = sbr.rel (0) target = $region17
    $region16: #{_enc_forward.1} parent=1 // pred_region
      %s52 = ssub.s32 16384, 16384
      %53 = vsyncadd [#allocation9], %s52
      %s54 = sshll.u32 [#allocation8], 4
      %s55 = int_to_ptr.vmem [resolvable:$true] %s54
      %60 = dma.hbm_to_vmem [thread:$0]  %s3, 16384, %s55, [#allocation9], 256, 256, 16
    $region17: #{_enc_forward.1} parent=1 // pred_fallthru
      _
    // Predicated region
    $region18: #{_enc_forward.1} parent=1 // pred_check
      _
    $region19: #{_enc_forward.1} parent=1 // pred_check_branch
      %62 = sbr.rel (0) target = $region21
    $region20: #{_enc_forward.1} parent=1 // pred_region
      %s64 = ssub.s32 64, 64
      %65 = vsyncadd [#allocation9], %s64
      %s67 = sshll.u32 [#allocation10], 4
      %s68 = int_to_ptr.vmem [resolvable:$true] %s67
      %70 = dma.hbm_to_vmem [thread:$0]  %s4, 64, %s68, [#allocation9]
    $region21: #{_enc_forward.1} parent=1 // pred_fallthru
      _
    // Predicated region
    $region22: #{_enc_forward.1} parent=1 // pred_check
      _
    $region23: #{_enc_forward.1} parent=1 // pred_check_branch
      %72 = sbr.rel (0) target = $region25
    $region24: #{_enc_forward.1} parent=1 // pred_region
      %s74 = ssub.s32 4096, 4096
      %75 = vsyncadd [#allocation12], %s74
      %s76 = sshll.u32 [#allocation11], 4
      %s77 = int_to_ptr.vmem [resolvable:$true] %s76
      %82 = dma.hbm_to_vmem [thread:$0]  %s5, 4096, %s77, [#allocation12], 64, 64, 4
    $region25: #{_enc_forward.1} parent=1 // pred_fallthru
      _
    // Predicated region
    $region26: #{_enc_forward.1} parent=1 // pred_check
      _
    $region27: #{_enc_forward.1} parent=1 // pred_check_branch
      %84 = sbr.rel (0) target = $region29
    $region28: #{_enc_forward.1} parent=1 // pred_region
      %s86 = ssub.s32 16, 16
      %87 = vsyncadd [#allocation12], %s86
      %s89 = sshll.u32 [#allocation13], 4
      %s90 = int_to_ptr.vmem [resolvable:$true] %s89
      %92 = dma.hbm_to_vmem [thread:$0]  %s6, 16, %s90, [#allocation12]
    $region29: #{_enc_forward.1} parent=1 // pred_fallthru
      _
    // Predicated region
    $region30: #{_enc_forward.1} parent=1 // pred_check
      _
    $region31: #{_enc_forward.1} parent=1 // pred_check_branch
      %94 = sbr.rel (0) target = $region33
    $region32: #{_enc_forward.1} parent=1 // pred_region
      %95 = dma.done [#allocation3], 64
    $region33: #{_enc_forward.1} parent=1 // pred_fallthru
      _
    // Predicated region
    $region34: #{_enc_forward.1} parent=1 // pred_check
      _
    $region35: #{_enc_forward.1} parent=1 // pred_check_branch
      %97 = sbr.rel (0) target = $region37
    $region36: #{_enc_forward.1} parent=1 // pred_region
      %98 = dma.done [#allocation6], 4096
    $region37: #{_enc_forward.1} parent=1 // pred_fallthru
      _
    // Predicated region
    $region38: #{_enc_forward.1} parent=1 // pred_check
      _
    $region39: #{_enc_forward.1} parent=1 // pred_check_branch
      %100 = sbr.rel (0) target = $region41
    $region40: #{_enc_forward.1} parent=1 // pred_region
      %101 = dma.done [#allocation6], 64
    $region41: #{_enc_forward.1} parent=1 // pred_fallthru
      _
    // Predicated region
    $region42: #{_enc_forward.1} parent=1 // pred_check
      _
    $region43: #{_enc_forward.1} parent=1 // pred_check_branch
      %103 = sbr.rel (0) target = $region45
    $region44: #{_enc_forward.1} parent=1 // pred_region
      %104 = dma.done [#allocation9], 16384
    $region45: #{_enc_forward.1} parent=1 // pred_fallthru
      _
    // Predicated region
    $region46: #{_enc_forward.1} parent=1 // pred_check
      _
    $region47: #{_enc_forward.1} parent=1 // pred_check_branch
      %106 = sbr.rel (0) target = $region49
    $region48: #{_enc_forward.1} parent=1 // pred_region
      %107 = dma.done [#allocation9], 64
    $region49: #{_enc_forward.1} parent=1 // pred_fallthru
      _
    // Predicated region
    $region50: #{_enc_forward.1} parent=1 // pred_check
      _
    $region51: #{_enc_forward.1} parent=1 // pred_check_branch
      %109 = sbr.rel (0) target = $region53
    $region52: #{_enc_forward.1} parent=1 // pred_region
      %110 = dma.done [#allocation12], 4096
    $region53: #{_enc_forward.1} parent=1 // pred_fallthru
      _
    // Predicated region
    $region54: #{_enc_forward.1} parent=1 // pred_check
      _
    $region55: #{_enc_forward.1} parent=1 // pred_check_branch
      %112 = sbr.rel (0) target = $region57
    $region56: #{_enc_forward.1} parent=1 // pred_region
      %113 = dma.done [#allocation12], 16
    $region57: #{_enc_forward.1} parent=1 // pred_fallthru
      _
    %v115 = vld [vmem:[#allocation2] sm:$0xf]
    %v116 = vld [vmem:[#allocation5] sm:$0xff]
    %v117 = vld [vmem:[#allocation5 + $0x8] sm:$0xff]
    %v118 = vld [vmem:[#allocation5 + $0x10] sm:$0xff]
    %v119 = vld [vmem:[#allocation5 + $0x18] sm:$0xff]
    %v120 = vld [vmem:[#allocation5 + $0x20] sm:$0xff]
    %v121 = vld [vmem:[#allocation5 + $0x28] sm:$0xff]
    %v122 = vld [vmem:[#allocation5 + $0x30] sm:$0xff]
    %v123 = vld [vmem:[#allocation5 + $0x38] sm:$0xff]
    %v124 = vld [vmem:[#allocation5 + $0x40] sm:$0xff]
    %v125 = vld [vmem:[#allocation5 + $0x48] sm:$0xff]
    %v126 = vld [vmem:[#allocation5 + $0x50] sm:$0xff]
    %v127 = vld [vmem:[#allocation5 + $0x58] sm:$0xff]
    %v128 = vld [vmem:[#allocation5 + $0x60] sm:$0xff]
    %v129 = vld [vmem:[#allocation5 + $0x68] sm:$0xff]
    %v130 = vld [vmem:[#allocation5 + $0x70] sm:$0xff]
    %v131 = vld [vmem:[#allocation5 + $0x78] sm:$0xff]
    %v132 = vld [vmem:[#allocation5 + $0x80] sm:$0xff]
    %v133 = vld [vmem:[#allocation5 + $0x88] sm:$0xff]
    %v134 = vld [vmem:[#allocation5 + $0x90] sm:$0xff]
    %v135 = vld [vmem:[#allocation5 + $0x98] sm:$0xff]
    %v136 = vld [vmem:[#allocation5 + $0xa0] sm:$0xff]
    %v137 = vld [vmem:[#allocation5 + $0xa8] sm:$0xff]
    %v138 = vld [vmem:[#allocation5 + $0xb0] sm:$0xff]
    %v139 = vld [vmem:[#allocation5 + $0xb8] sm:$0xff]
    %v140 = vld [vmem:[#allocation5 + $0xc0] sm:$0xff]
    %v141 = vld [vmem:[#allocation5 + $0xc8] sm:$0xff]
    %v142 = vld [vmem:[#allocation5 + $0xd0] sm:$0xff]
    %v143 = vld [vmem:[#allocation5 + $0xd8] sm:$0xff]
    %v144 = vld [vmem:[#allocation5 + $0xe0] sm:$0xff]
    %v145 = vld [vmem:[#allocation5 + $0xe8] sm:$0xff]
    %v146 = vld [vmem:[#allocation5 + $0xf0] sm:$0xff]
    %v147 = vld [vmem:[#allocation5 + $0xf8] sm:$0xff]
    %v148 = vld [vmem:[#allocation7] sm:$0xf]
    %v150 = vlaneseq
    %v151 = vshrl.u32 %v150, 7
    %v152 = vsub.s32 0, %v151
    %v153 = vrot.slane %v148, %v152
    %v154 = vlaneseq
    %v155 = vshrl.u32 %v154, 7
    %v156 = vsub.s32 1, %v155
    %v157 = vrot.slane %v148, %v156
    %v158 = vlaneseq
    %v159 = vshrl.u32 %v158, 7
    %v160 = vsub.s32 2, %v159
    %v161 = vrot.slane %v148, %v160
    %v162 = vlaneseq
    %v163 = vshrl.u32 %v162, 7
    %v164 = vsub.s32 3, %v163
    %v165 = vrot.slane %v148, %v164
    %v202 = vunpack.c.l.b16 %v116
    %v203 = vunpack.c.h.b16 %v116
    %v204 = vunpack.c.l.b16 %v117
    %v205 = vunpack.c.h.b16 %v117
    %v206 = vunpack.c.l.b16 %v118
    %v207 = vunpack.c.h.b16 %v118
    %v208 = vunpack.c.l.b16 %v119
    %v209 = vunpack.c.h.b16 %v119
    %v210 = vunpack.c.l.b16 %v120
    %v211 = vunpack.c.h.b16 %v120
    %v212 = vunpack.c.l.b16 %v121
    %v213 = vunpack.c.h.b16 %v121
    %v214 = vunpack.c.l.b16 %v122
    %v215 = vunpack.c.h.b16 %v122
    %v216 = vunpack.c.l.b16 %v123
    %v217 = vunpack.c.h.b16 %v123
    %v218 = vunpack.c.l.b16 %v124
    %v219 = vunpack.c.h.b16 %v124
    %v220 = vunpack.c.l.b16 %v125
    %v221 = vunpack.c.h.b16 %v125
    %v222 = vunpack.c.l.b16 %v126
    %v223 = vunpack.c.h.b16 %v126
    %v224 = vunpack.c.l.b16 %v127
    %v225 = vunpack.c.h.b16 %v127
    %v226 = vunpack.c.l.b16 %v128
    %v227 = vunpack.c.h.b16 %v128
    %v228 = vunpack.c.l.b16 %v129
    %v229 = vunpack.c.h.b16 %v129
    %v230 = vunpack.c.l.b16 %v130
    %v231 = vunpack.c.h.b16 %v130
    %v232 = vunpack.c.l.b16 %v131
    %v233 = vunpack.c.h.b16 %v131
    %v234 = vunpack.c.l.b16 %v132
    %v235 = vunpack.c.h.b16 %v132
    %v236 = vunpack.c.l.b16 %v133
    %v237 = vunpack.c.h.b16 %v133
    %v238 = vunpack.c.l.b16 %v134
    %v239 = vunpack.c.h.b16 %v134
    %v240 = vunpack.c.l.b16 %v135
    %v241 = vunpack.c.h.b16 %v135
    %v242 = vunpack.c.l.b16 %v136
    %v243 = vunpack.c.h.b16 %v136
    %v244 = vunpack.c.l.b16 %v137
    %v245 = vunpack.c.h.b16 %v137
    %v246 = vunpack.c.l.b16 %v138
    %v247 = vunpack.c.h.b16 %v138
    %v248 = vunpack.c.l.b16 %v139
    %v249 = vunpack.c.h.b16 %v139
    %v250 = vunpack.c.l.b16 %v140
    %v251 = vunpack.c.h.b16 %v140
    %v252 = vunpack.c.l.b16 %v141
    %v253 = vunpack.c.h.b16 %v141
    %v254 = vunpack.c.l.b16 %v142
    %v255 = vunpack.c.h.b16 %v142
    %v256 = vunpack.c.l.b16 %v143
    %v257 = vunpack.c.h.b16 %v143
    %v258 = vunpack.c.l.b16 %v144
    %v259 = vunpack.c.h.b16 %v144
    %v260 = vunpack.c.l.b16 %v145
    %v261 = vunpack.c.h.b16 %v145
    %v262 = vunpack.c.l.b16 %v146
    %v263 = vunpack.c.h.b16 %v146
    %v264 = vunpack.c.l.b16 %v147
    %v265 = vunpack.c.h.b16 %v147
    %v266 = vpack.c.b16 %v206, %v202
    %v267 = vpack.c.b16 %v207, %v203
    %v268 = vpack.c.b16 %v208, %v204
    %v269 = vpack.c.b16 %v209, %v205
    %v270 = vpack.c.b16 %v214, %v210
    %v271 = vpack.c.b16 %v215, %v211
    %v272 = vpack.c.b16 %v216, %v212
    %v273 = vpack.c.b16 %v217, %v213
    %v274 = vpack.c.b16 %v222, %v218
    %v275 = vpack.c.b16 %v223, %v219
    %v276 = vpack.c.b16 %v224, %v220
    %v277 = vpack.c.b16 %v225, %v221
    %v278 = vpack.c.b16 %v230, %v226
    %v279 = vpack.c.b16 %v231, %v227
    %v280 = vpack.c.b16 %v232, %v228
    %v281 = vpack.c.b16 %v233, %v229
    %v282 = vpack.c.b16 %v238, %v234
    %v283 = vpack.c.b16 %v239, %v235
    %v284 = vpack.c.b16 %v240, %v236
    %v285 = vpack.c.b16 %v241, %v237
    %v286 = vpack.c.b16 %v246, %v242
    %v287 = vpack.c.b16 %v247, %v243
    %v288 = vpack.c.b16 %v248, %v244
    %v289 = vpack.c.b16 %v249, %v245
    %v290 = vpack.c.b16 %v254, %v250
    %v291 = vpack.c.b16 %v255, %v251
    %v292 = vpack.c.b16 %v256, %v252
    %v293 = vpack.c.b16 %v257, %v253
    %v294 = vpack.c.b16 %v262, %v258
    %v295 = vpack.c.b16 %v263, %v259
    %v296 = vpack.c.b16 %v264, %v260
    %v297 = vpack.c.b16 %v265, %v261
    %330 = vmatprep.subr.bf16.mxu0 %v267
    %331 = vmatpush1.bf16.msra.mxu0 %v266
    %332 = vmatprep.subr.bf16.mxu0 %v271
    %333 = vmatpush1.bf16.msra.mxu0 %v270
    %334 = vmatprep.subr.bf16.mxu0 %v275
    %335 = vmatpush1.bf16.msra.mxu0 %v274
    %336 = vmatprep.subr.bf16.mxu0 %v279
    %337 = vmatpush1.bf16.msra.mxu0 %v278
    %338 = vmatprep.subr.bf16.mxu0 %v283
    %339 = vmatpush1.bf16.msra.mxu0 %v282
    %340 = vmatprep.subr.bf16.mxu0 %v287
    %341 = vmatpush1.bf16.msra.mxu0 %v286
    %342 = vmatprep.subr.bf16.mxu0 %v291
    %343 = vmatpush1.bf16.msra.mxu0 %v290
    %344 = vmatprep.subr.bf16.mxu0 %v295
    %345 = vmatpush1.bf16.msra.mxu0 %v294
    %346 = vmatprep.subr.bf16.mxu0 0
    %347 = vmatpush1.bf16.msra.mxu0 0
    %348 = vmatprep.subr.bf16.mxu0 0
    %349 = vmatpush1.bf16.msra.mxu0 0
    %350 = vmatprep.subr.bf16.mxu0 0
    %351 = vmatpush1.bf16.msra.mxu0 0
    %352 = vmatprep.subr.bf16.mxu0 0
    %353 = vmatpush1.bf16.msra.mxu0 0
    %354 = vmatprep.subr.bf16.mxu0 0
    %355 = vmatpush1.bf16.msra.mxu0 0
    %356 = vmatprep.subr.bf16.mxu0 0
    %357 = vmatpush1.bf16.msra.mxu0 0
    %358 = vmatprep.subr.bf16.mxu0 0
    %359 = vmatpush1.bf16.msra.mxu0 0
    %360 = vmatprep.subr.bf16.mxu0 0
    %361 = vmatpush1.bf16.msra.mxu0 0
    %362 = vmatprep.mubr.bf16.mxu0 0
    %363 = vmatmul.mubr.bf16.gmra.mrb[0].mxu0 %v115
    %v364 = vpop.f32.mrb[0].mxu0
    %v365 = vadd.f32 %v153, %v364
    %v366 = vpop.f32.mrb[0].mxu0
    %v367 = vadd.f32 %v157, %v366
    %v368 = vpop.f32.mrb[0].mxu0
    %v369 = vpop.f32.mrb[0].mxu0
    %370 = vdwg.mxu0
    %371 = vmatprep.subr.bf16.mxu0 %v269
    %372 = vmatpush1.bf16.msra.mxu0 %v268
    %373 = vmatprep.subr.bf16.mxu0 %v273
    %374 = vmatpush1.bf16.msra.mxu0 %v272
    %375 = vmatprep.subr.bf16.mxu0 %v277
    %376 = vmatpush1.bf16.msra.mxu0 %v276
    %377 = vmatprep.subr.bf16.mxu0 %v281
    %378 = vmatpush1.bf16.msra.mxu0 %v280
    %379 = vmatprep.subr.bf16.mxu0 %v285
    %380 = vmatpush1.bf16.msra.mxu0 %v284
    %381 = vmatprep.subr.bf16.mxu0 %v289
    %382 = vmatpush1.bf16.msra.mxu0 %v288
    %383 = vmatprep.subr.bf16.mxu0 %v293
    %384 = vmatpush1.bf16.msra.mxu0 %v292
    %385 = vmatprep.subr.bf16.mxu0 %v297
    %386 = vmatpush1.bf16.msra.mxu0 %v296
    %387 = vmatprep.subr.bf16.mxu0 0
    %388 = vmatpush1.bf16.msra.mxu0 0
    %389 = vmatprep.subr.bf16.mxu0 0
    %390 = vmatpush1.bf16.msra.mxu0 0
    %391 = vmatprep.subr.bf16.mxu0 0
    %392 = vmatpush1.bf16.msra.mxu0 0
    %393 = vmatprep.subr.bf16.mxu0 0
    %394 = vmatpush1.bf16.msra.mxu0 0
    %395 = vmatprep.subr.bf16.mxu0 0
    %396 = vmatpush1.bf16.msra.mxu0 0
    %397 = vmatprep.subr.bf16.mxu0 0
    %398 = vmatpush1.bf16.msra.mxu0 0
    %399 = vmatprep.subr.bf16.mxu0 0
    %400 = vmatpush1.bf16.msra.mxu0 0
    %401 = vmatprep.subr.bf16.mxu0 0
    %402 = vmatpush1.bf16.msra.mxu0 0
    %403 = vmatprep.mubr.bf16.mxu0 0
    %404 = vmatmul.mubr.bf16.gmra.mrb[0].mxu0 %v115
    %v405 = vpop.f32.mrb[0].mxu0
    %v406 = vadd.f32 %v161, %v405
    %v407 = vpop.f32.mrb[0].mxu0
    %v408 = vadd.f32 %v165, %v407
    %v409 = vpop.f32.mrb[0].mxu0
    %v410 = vpop.f32.mrb[0].mxu0
    %411 = vdwg.mxu0
    %v412 = vmax.f32 %v365, 0.0
    %v413 = vmax.f32 %v367, 0.0
    %v414 = vmax.f32 %v406, 0.0
    %v415 = vmax.f32 %v408, 0.0
    %v416 = vpack.c.bf16 %v412, %v412
    %v417 = vpack.c.bf16 %v413, %v413
    %v418 = vpack.c.bf16 %v414, %v414
    %v419 = vpack.c.bf16 %v415, %v415
    %v420 = vld [vmem:[#allocation8] sm:$0xff]
    %v421 = vld [vmem:[#allocation8 + $0x8] sm:$0xff]
    %v422 = vld [vmem:[#allocation8 + $0x10] sm:$0xff]
    %v423 = vld [vmem:[#allocation8 + $0x18] sm:$0xff]
    %v424 = vld [vmem:[#allocation8 + $0x20] sm:$0xff]
    %v425 = vld [vmem:[#allocation8 + $0x28] sm:$0xff]
    %v426 = vld [vmem:[#allocation8 + $0x30] sm:$0xff]
    %v427 = vld [vmem:[#allocation8 + $0x38] sm:$0xff]
    %v428 = vld [vmem:[#allocation8 + $0x40] sm:$0xff]
    %v429 = vld [vmem:[#allocation8 + $0x48] sm:$0xff]
    %v430 = vld [vmem:[#allocation8 + $0x50] sm:$0xff]
    %v431 = vld [vmem:[#allocation8 + $0x58] sm:$0xff]
    %v432 = vld [vmem:[#allocation8 + $0x60] sm:$0xff]
    %v433 = vld [vmem:[#allocation8 + $0x68] sm:$0xff]
    %v434 = vld [vmem:[#allocation8 + $0x70] sm:$0xff]
    %v435 = vld [vmem:[#allocation8 + $0x78] sm:$0xff]
    %v436 = vld [vmem:[#allocation8 + $0x80] sm:$0xff]
    %v437 = vld [vmem:[#allocation8 + $0x88] sm:$0xff]
    %v438 = vld [vmem:[#allocation8 + $0x90] sm:$0xff]
    %v439 = vld [vmem:[#allocation8 + $0x98] sm:$0xff]
    %v440 = vld [vmem:[#allocation8 + $0xa0] sm:$0xff]
    %v441 = vld [vmem:[#allocation8 + $0xa8] sm:$0xff]
    %v442 = vld [vmem:[#allocation8 + $0xb0] sm:$0xff]
    %v443 = vld [vmem:[#allocation8 + $0xb8] sm:$0xff]
    %v444 = vld [vmem:[#allocation8 + $0xc0] sm:$0xff]
    %v445 = vld [vmem:[#allocation8 + $0xc8] sm:$0xff]
    %v446 = vld [vmem:[#allocation8 + $0xd0] sm:$0xff]
    %v447 = vld [vmem:[#allocation8 + $0xd8] sm:$0xff]
    %v448 = vld [vmem:[#allocation8 + $0xe0] sm:$0xff]
    %v449 = vld [vmem:[#allocation8 + $0xe8] sm:$0xff]
    %v450 = vld [vmem:[#allocation8 + $0xf0] sm:$0xff]
    %v451 = vld [vmem:[#allocation8 + $0xf8] sm:$0xff]
    %v452 = vld [vmem:[#allocation8 + $0x100] sm:$0xff]
    %v453 = vld [vmem:[#allocation8 + $0x108] sm:$0xff]
    %v454 = vld [vmem:[#allocation8 + $0x110] sm:$0xff]
    %v455 = vld [vmem:[#allocation8 + $0x118] sm:$0xff]
    %v456 = vld [vmem:[#allocation8 + $0x120] sm:$0xff]
    %v457 = vld [vmem:[#allocation8 + $0x128] sm:$0xff]
    %v458 = vld [vmem:[#allocation8 + $0x130] sm:$0xff]
    %v459 = vld [vmem:[#allocation8 + $0x138] sm:$0xff]
    %v460 = vld [vmem:[#allocation8 + $0x140] sm:$0xff]
    %v461 = vld [vmem:[#allocation8 + $0x148] sm:$0xff]
    %v462 = vld [vmem:[#allocation8 + $0x150] sm:$0xff]
    %v463 = vld [vmem:[#allocation8 + $0x158] sm:$0xff]
    %v464 = vld [vmem:[#allocation8 + $0x160] sm:$0xff]
    %v465 = vld [vmem:[#allocation8 + $0x168] sm:$0xff]
    %v466 = vld [vmem:[#allocation8 + $0x170] sm:$0xff]
    %v467 = vld [vmem:[#allocation8 + $0x178] sm:$0xff]
    %v468 = vld [vmem:[#allocation8 + $0x180] sm:$0xff]
    %v469 = vld [vmem:[#allocation8 + $0x188] sm:$0xff]
    %v470 = vld [vmem:[#allocation8 + $0x190] sm:$0xff]
    %v471 = vld [vmem:[#allocation8 + $0x198] sm:$0xff]
    %v472 = vld [vmem:[#allocation8 + $0x1a0] sm:$0xff]
    %v473 = vld [vmem:[#allocation8 + $0x1a8] sm:$0xff]
    %v474 = vld [vmem:[#allocation8 + $0x1b0] sm:$0xff]
    %v475 = vld [vmem:[#allocation8 + $0x1b8] sm:$0xff]
    %v476 = vld [vmem:[#allocation8 + $0x1c0] sm:$0xff]
    %v477 = vld [vmem:[#allocation8 + $0x1c8] sm:$0xff]
    %v478 = vld [vmem:[#allocation8 + $0x1d0] sm:$0xff]
    %v479 = vld [vmem:[#allocation8 + $0x1d8] sm:$0xff]
    %v480 = vld [vmem:[#allocation8 + $0x1e0] sm:$0xff]
    %v481 = vld [vmem:[#allocation8 + $0x1e8] sm:$0xff]
    %v482 = vld [vmem:[#allocation8 + $0x1f0] sm:$0xff]
    %v483 = vld [vmem:[#allocation8 + $0x1f8] sm:$0xff]
    %v484 = vld [vmem:[#allocation8 + $0x200] sm:$0xff]
    %v485 = vld [vmem:[#allocation8 + $0x208] sm:$0xff]
    %v486 = vld [vmem:[#allocation8 + $0x210] sm:$0xff]
    %v487 = vld [vmem:[#allocation8 + $0x218] sm:$0xff]
    %v488 = vld [vmem:[#allocation8 + $0x220] sm:$0xff]
    %v489 = vld [vmem:[#allocation8 + $0x228] sm:$0xff]
    %v490 = vld [vmem:[#allocation8 + $0x230] sm:$0xff]
    %v491 = vld [vmem:[#allocation8 + $0x238] sm:$0xff]
    %v492 = vld [vmem:[#allocation8 + $0x240] sm:$0xff]
    %v493 = vld [vmem:[#allocation8 + $0x248] sm:$0xff]
    %v494 = vld [vmem:[#allocation8 + $0x250] sm:$0xff]
    %v495 = vld [vmem:[#allocation8 + $0x258] sm:$0xff]
    %v496 = vld [vmem:[#allocation8 + $0x260] sm:$0xff]
    %v497 = vld [vmem:[#allocation8 + $0x268] sm:$0xff]
    %v498 = vld [vmem:[#allocation8 + $0x270] sm:$0xff]
    %v499 = vld [vmem:[#allocation8 + $0x278] sm:$0xff]
    %v500 = vld [vmem:[#allocation8 + $0x280] sm:$0xff]
    %v501 = vld [vmem:[#allocation8 + $0x288] sm:$0xff]
    %v502 = vld [vmem:[#allocation8 + $0x290] sm:$0xff]
    %v503 = vld [vmem:[#allocation8 + $0x298] sm:$0xff]
    %v504 = vld [vmem:[#allocation8 + $0x2a0] sm:$0xff]
    %v505 = vld [vmem:[#allocation8 + $0x2a8] sm:$0xff]
    %v506 = vld [vmem:[#allocation8 + $0x2b0] sm:$0xff]
    %v507 = vld [vmem:[#allocation8 + $0x2b8] sm:$0xff]
    %v508 = vld [vmem:[#allocation8 + $0x2c0] sm:$0xff]
    %v509 = vld [vmem:[#allocation8 + $0x2c8] sm:$0xff]
    %v510 = vld [vmem:[#allocation8 + $0x2d0] sm:$0xff]
    %v511 = vld [vmem:[#allocation8 + $0x2d8] sm:$0xff]
    %v512 = vld [vmem:[#allocation8 + $0x2e0] sm:$0xff]
    %v513 = vld [vmem:[#allocation8 + $0x2e8] sm:$0xff]
    %v514 = vld [vmem:[#allocation8 + $0x2f0] sm:$0xff]
    %v515 = vld [vmem:[#allocation8 + $0x2f8] sm:$0xff]
    %v516 = vld [vmem:[#allocation8 + $0x300] sm:$0xff]
    %v517 = vld [vmem:[#allocation8 + $0x308] sm:$0xff]
    %v518 = vld [vmem:[#allocation8 + $0x310] sm:$0xff]
    %v519 = vld [vmem:[#allocation8 + $0x318] sm:$0xff]
    %v520 = vld [vmem:[#allocation8 + $0x320] sm:$0xff]
    %v521 = vld [vmem:[#allocation8 + $0x328] sm:$0xff]
    %v522 = vld [vmem:[#allocation8 + $0x330] sm:$0xff]
    %v523 = vld [vmem:[#allocation8 + $0x338] sm:$0xff]
    %v524 = vld [vmem:[#allocation8 + $0x340] sm:$0xff]
    %v525 = vld [vmem:[#allocation8 + $0x348] sm:$0xff]
    %v526 = vld [vmem:[#allocation8 + $0x350] sm:$0xff]
    %v527 = vld [vmem:[#allocation8 + $0x358] sm:$0xff]
    %v528 = vld [vmem:[#allocation8 + $0x360] sm:$0xff]
    %v529 = vld [vmem:[#allocation8 + $0x368] sm:$0xff]
    %v530 = vld [vmem:[#allocation8 + $0x370] sm:$0xff]
    %v531 = vld [vmem:[#allocation8 + $0x378] sm:$0xff]
    %v532 = vld [vmem:[#allocation8 + $0x380] sm:$0xff]
    %v533 = vld [vmem:[#allocation8 + $0x388] sm:$0xff]
    %v534 = vld [vmem:[#allocation8 + $0x390] sm:$0xff]
    %v535 = vld [vmem:[#allocation8 + $0x398] sm:$0xff]
    %v536 = vld [vmem:[#allocation8 + $0x3a0] sm:$0xff]
    %v537 = vld [vmem:[#allocation8 + $0x3a8] sm:$0xff]
    %v538 = vld [vmem:[#allocation8 + $0x3b0] sm:$0xff]
    %v539 = vld [vmem:[#allocation8 + $0x3b8] sm:$0xff]
    %v540 = vld [vmem:[#allocation8 + $0x3c0] sm:$0xff]
    %v541 = vld [vmem:[#allocation8 + $0x3c8] sm:$0xff]
    %v542 = vld [vmem:[#allocation8 + $0x3d0] sm:$0xff]
    %v543 = vld [vmem:[#allocation8 + $0x3d8] sm:$0xff]
    %v544 = vld [vmem:[#allocation8 + $0x3e0] sm:$0xff]
    %v545 = vld [vmem:[#allocation8 + $0x3e8] sm:$0xff]
    %v546 = vld [vmem:[#allocation8 + $0x3f0] sm:$0xff]
    %v547 = vld [vmem:[#allocation8 + $0x3f8] sm:$0xff]
    %v548 = vld [vmem:[#allocation10] sm:$0xf]
    %v550 = vlaneseq
    %v551 = vshrl.u32 %v550, 7
    %v552 = vsub.s32 0, %v551
    %v553 = vrot.slane %v548, %v552
    %v554 = vlaneseq
    %v555 = vshrl.u32 %v554, 7
    %v556 = vsub.s32 1, %v555
    %v557 = vrot.slane %v548, %v556
    %v558 = vlaneseq
    %v559 = vshrl.u32 %v558, 7
    %v560 = vsub.s32 2, %v559
    %v561 = vrot.slane %v548, %v560
    %v562 = vlaneseq
    %v563 = vshrl.u32 %v562, 7
    %v564 = vsub.s32 3, %v563
    %v565 = vrot.slane %v548, %v564
    %v698 = vunpack.c.l.b16 %v420
    %v699 = vunpack.c.h.b16 %v420
    %v700 = vunpack.c.l.b16 %v421
    %v701 = vunpack.c.h.b16 %v421
    %v702 = vunpack.c.l.b16 %v422
    %v703 = vunpack.c.h.b16 %v422
    %v704 = vunpack.c.l.b16 %v423
    %v705 = vunpack.c.h.b16 %v423
    %v706 = vunpack.c.l.b16 %v424
    %v707 = vunpack.c.h.b16 %v424
    %v708 = vunpack.c.l.b16 %v425
    %v709 = vunpack.c.h.b16 %v425
    %v710 = vunpack.c.l.b16 %v426
    %v711 = vunpack.c.h.b16 %v426
    %v712 = vunpack.c.l.b16 %v427
    %v713 = vunpack.c.h.b16 %v427
    %v714 = vunpack.c.l.b16 %v428
    %v715 = vunpack.c.h.b16 %v428
    %v716 = vunpack.c.l.b16 %v429
    %v717 = vunpack.c.h.b16 %v429
    %v718 = vunpack.c.l.b16 %v430
    %v719 = vunpack.c.h.b16 %v430
    %v720 = vunpack.c.l.b16 %v431
    %v721 = vunpack.c.h.b16 %v431
    %v722 = vunpack.c.l.b16 %v432
    %v723 = vunpack.c.h.b16 %v432
    %v724 = vunpack.c.l.b16 %v433
    %v725 = vunpack.c.h.b16 %v433
    %v726 = vunpack.c.l.b16 %v434
    %v727 = vunpack.c.h.b16 %v434
    %v728 = vunpack.c.l.b16 %v435
    %v729 = vunpack.c.h.b16 %v435
    %v730 = vunpack.c.l.b16 %v436
    %v731 = vunpack.c.h.b16 %v436
    %v732 = vunpack.c.l.b16 %v437
    %v733 = vunpack.c.h.b16 %v437
    %v734 = vunpack.c.l.b16 %v438
    %v735 = vunpack.c.h.b16 %v438
    %v736 = vunpack.c.l.b16 %v439
    %v737 = vunpack.c.h.b16 %v439
    %v738 = vunpack.c.l.b16 %v440
    %v739 = vunpack.c.h.b16 %v440
    %v740 = vunpack.c.l.b16 %v441
    %v741 = vunpack.c.h.b16 %v441
    %v742 = vunpack.c.l.b16 %v442
    %v743 = vunpack.c.h.b16 %v442
    %v744 = vunpack.c.l.b16 %v443
    %v745 = vunpack.c.h.b16 %v443
    %v746 = vunpack.c.l.b16 %v444
    %v747 = vunpack.c.h.b16 %v444
    %v748 = vunpack.c.l.b16 %v445
    %v749 = vunpack.c.h.b16 %v445
    %v750 = vunpack.c.l.b16 %v446
    %v751 = vunpack.c.h.b16 %v446
    %v752 = vunpack.c.l.b16 %v447
    %v753 = vunpack.c.h.b16 %v447
    %v754 = vunpack.c.l.b16 %v448
    %v755 = vunpack.c.h.b16 %v448
    %v756 = vunpack.c.l.b16 %v449
    %v757 = vunpack.c.h.b16 %v449
    %v758 = vunpack.c.l.b16 %v450
    %v759 = vunpack.c.h.b16 %v450
    %v760 = vunpack.c.l.b16 %v451
    %v761 = vunpack.c.h.b16 %v451
    %v762 = vunpack.c.l.b16 %v452
    %v763 = vunpack.c.h.b16 %v452
    %v764 = vunpack.c.l.b16 %v453
    %v765 = vunpack.c.h.b16 %v453
    %v766 = vunpack.c.l.b16 %v454
    %v767 = vunpack.c.h.b16 %v454
    %v768 = vunpack.c.l.b16 %v455
    %v769 = vunpack.c.h.b16 %v455
    %v770 = vunpack.c.l.b16 %v456
    %v771 = vunpack.c.h.b16 %v456
    %v772 = vunpack.c.l.b16 %v457
    %v773 = vunpack.c.h.b16 %v457
    %v774 = vunpack.c.l.b16 %v458
    %v775 = vunpack.c.h.b16 %v458
    %v776 = vunpack.c.l.b16 %v459
    %v777 = vunpack.c.h.b16 %v459
    %v778 = vunpack.c.l.b16 %v460
    %v779 = vunpack.c.h.b16 %v460
    %v780 = vunpack.c.l.b16 %v461
    %v781 = vunpack.c.h.b16 %v461
    %v782 = vunpack.c.l.b16 %v462
    %v783 = vunpack.c.h.b16 %v462
    %v784 = vunpack.c.l.b16 %v463
    %v785 = vunpack.c.h.b16 %v463
    %v786 = vunpack.c.l.b16 %v464
    %v787 = vunpack.c.h.b16 %v464
    %v788 = vunpack.c.l.b16 %v465
    %v789 = vunpack.c.h.b16 %v465
    %v790 = vunpack.c.l.b16 %v466
    %v791 = vunpack.c.h.b16 %v466
    %v792 = vunpack.c.l.b16 %v467
    %v793 = vunpack.c.h.b16 %v467
    %v794 = vunpack.c.l.b16 %v468
    %v795 = vunpack.c.h.b16 %v468
    %v796 = vunpack.c.l.b16 %v469
    %v797 = vunpack.c.h.b16 %v469
    %v798 = vunpack.c.l.b16 %v470
    %v799 = vunpack.c.h.b16 %v470
    %v800 = vunpack.c.l.b16 %v471
    %v801 = vunpack.c.h.b16 %v471
    %v802 = vunpack.c.l.b16 %v472
    %v803 = vunpack.c.h.b16 %v472
    %v804 = vunpack.c.l.b16 %v473
    %v805 = vunpack.c.h.b16 %v473
    %v806 = vunpack.c.l.b16 %v474
    %v807 = vunpack.c.h.b16 %v474
    %v808 = vunpack.c.l.b16 %v475
    %v809 = vunpack.c.h.b16 %v475
    %v810 = vunpack.c.l.b16 %v476
    %v811 = vunpack.c.h.b16 %v476
    %v812 = vunpack.c.l.b16 %v477
    %v813 = vunpack.c.h.b16 %v477
    %v814 = vunpack.c.l.b16 %v478
    %v815 = vunpack.c.h.b16 %v478
    %v816 = vunpack.c.l.b16 %v479
    %v817 = vunpack.c.h.b16 %v479
    %v818 = vunpack.c.l.b16 %v480
    %v819 = vunpack.c.h.b16 %v480
    %v820 = vunpack.c.l.b16 %v481
    %v821 = vunpack.c.h.b16 %v481
    %v822 = vunpack.c.l.b16 %v482
    %v823 = vunpack.c.h.b16 %v482
    %v824 = vunpack.c.l.b16 %v483
    %v825 = vunpack.c.h.b16 %v483
    %v826 = vunpack.c.l.b16 %v484
    %v827 = vunpack.c.h.b16 %v484
    %v828 = vunpack.c.l.b16 %v485
    %v829 = vunpack.c.h.b16 %v485
    %v830 = vunpack.c.l.b16 %v486
    %v831 = vunpack.c.h.b16 %v486
    %v832 = vunpack.c.l.b16 %v487
    %v833 = vunpack.c.h.b16 %v487
    %v834 = vunpack.c.l.b16 %v488
    %v835 = vunpack.c.h.b16 %v488
    %v836 = vunpack.c.l.b16 %v489
    %v837 = vunpack.c.h.b16 %v489
    %v838 = vunpack.c.l.b16 %v490
    %v839 = vunpack.c.h.b16 %v490
    %v840 = vunpack.c.l.b16 %v491
    %v841 = vunpack.c.h.b16 %v491
    %v842 = vunpack.c.l.b16 %v492
    %v843 = vunpack.c.h.b16 %v492
    %v844 = vunpack.c.l.b16 %v493
    %v845 = vunpack.c.h.b16 %v493
    %v846 = vunpack.c.l.b16 %v494
    %v847 = vunpack.c.h.b16 %v494
    %v848 = vunpack.c.l.b16 %v495
    %v849 = vunpack.c.h.b16 %v495
    %v850 = vunpack.c.l.b16 %v496
    %v851 = vunpack.c.h.b16 %v496
    %v852 = vunpack.c.l.b16 %v497
    %v853 = vunpack.c.h.b16 %v497
    %v854 = vunpack.c.l.b16 %v498
    %v855 = vunpack.c.h.b16 %v498
    %v856 = vunpack.c.l.b16 %v499
    %v857 = vunpack.c.h.b16 %v499
    %v858 = vunpack.c.l.b16 %v500
    %v859 = vunpack.c.h.b16 %v500
    %v860 = vunpack.c.l.b16 %v501
    %v861 = vunpack.c.h.b16 %v501
    %v862 = vunpack.c.l.b16 %v502
    %v863 = vunpack.c.h.b16 %v502
    %v864 = vunpack.c.l.b16 %v503
    %v865 = vunpack.c.h.b16 %v503
    %v866 = vunpack.c.l.b16 %v504
    %v867 = vunpack.c.h.b16 %v504
    %v868 = vunpack.c.l.b16 %v505
    %v869 = vunpack.c.h.b16 %v505
    %v870 = vunpack.c.l.b16 %v506
    %v871 = vunpack.c.h.b16 %v506
    %v872 = vunpack.c.l.b16 %v507
    %v873 = vunpack.c.h.b16 %v507
    %v874 = vunpack.c.l.b16 %v508
    %v875 = vunpack.c.h.b16 %v508
    %v876 = vunpack.c.l.b16 %v509
    %v877 = vunpack.c.h.b16 %v509
    %v878 = vunpack.c.l.b16 %v510
    %v879 = vunpack.c.h.b16 %v510
    %v880 = vunpack.c.l.b16 %v511
    %v881 = vunpack.c.h.b16 %v511
    %v882 = vunpack.c.l.b16 %v512
    %v883 = vunpack.c.h.b16 %v512
    %v884 = vunpack.c.l.b16 %v513
    %v885 = vunpack.c.h.b16 %v513
    %v886 = vunpack.c.l.b16 %v514
    %v887 = vunpack.c.h.b16 %v514
    %v888 = vunpack.c.l.b16 %v515
    %v889 = vunpack.c.h.b16 %v515
    %v890 = vunpack.c.l.b16 %v516
    %v891 = vunpack.c.h.b16 %v516
    %v892 = vunpack.c.l.b16 %v517
    %v893 = vunpack.c.h.b16 %v517
    %v894 = vunpack.c.l.b16 %v518
    %v895 = vunpack.c.h.b16 %v518
    %v896 = vunpack.c.l.b16 %v519
    %v897 = vunpack.c.h.b16 %v519
    %v898 = vunpack.c.l.b16 %v520
    %v899 = vunpack.c.h.b16 %v520
    %v900 = vunpack.c.l.b16 %v521
    %v901 = vunpack.c.h.b16 %v521
    %v902 = vunpack.c.l.b16 %v522
    %v903 = vunpack.c.h.b16 %v522
    %v904 = vunpack.c.l.b16 %v523
    %v905 = vunpack.c.h.b16 %v523
    %v906 = vunpack.c.l.b16 %v524
    %v907 = vunpack.c.h.b16 %v524
    %v908 = vunpack.c.l.b16 %v525
    %v909 = vunpack.c.h.b16 %v525
    %v910 = vunpack.c.l.b16 %v526
    %v911 = vunpack.c.h.b16 %v526
    %v912 = vunpack.c.l.b16 %v527
    %v913 = vunpack.c.h.b16 %v527
    %v914 = vunpack.c.l.b16 %v528
    %v915 = vunpack.c.h.b16 %v528
    %v916 = vunpack.c.l.b16 %v529
    %v917 = vunpack.c.h.b16 %v529
    %v918 = vunpack.c.l.b16 %v530
    %v919 = vunpack.c.h.b16 %v530
    %v920 = vunpack.c.l.b16 %v531
    %v921 = vunpack.c.h.b16 %v531
    %v922 = vunpack.c.l.b16 %v532
    %v923 = vunpack.c.h.b16 %v532
    %v924 = vunpack.c.l.b16 %v533
    %v925 = vunpack.c.h.b16 %v533
    %v926 = vunpack.c.l.b16 %v534
    %v927 = vunpack.c.h.b16 %v534
    %v928 = vunpack.c.l.b16 %v535
    %v929 = vunpack.c.h.b16 %v535
    %v930 = vunpack.c.l.b16 %v536
    %v931 = vunpack.c.h.b16 %v536
    %v932 = vunpack.c.l.b16 %v537
    %v933 = vunpack.c.h.b16 %v537
    %v934 = vunpack.c.l.b16 %v538
    %v935 = vunpack.c.h.b16 %v538
    %v936 = vunpack.c.l.b16 %v539
    %v937 = vunpack.c.h.b16 %v539
    %v938 = vunpack.c.l.b16 %v540
    %v939 = vunpack.c.h.b16 %v540
    %v940 = vunpack.c.l.b16 %v541
    %v941 = vunpack.c.h.b16 %v541
    %v942 = vunpack.c.l.b16 %v542
    %v943 = vunpack.c.h.b16 %v542
    %v944 = vunpack.c.l.b16 %v543
    %v945 = vunpack.c.h.b16 %v543
    %v946 = vunpack.c.l.b16 %v544
    %v947 = vunpack.c.h.b16 %v544
    %v948 = vunpack.c.l.b16 %v545
    %v949 = vunpack.c.h.b16 %v545
    %v950 = vunpack.c.l.b16 %v546
    %v951 = vunpack.c.h.b16 %v546
    %v952 = vunpack.c.l.b16 %v547
    %v953 = vunpack.c.h.b16 %v547
    %v954 = vpack.c.b16 %v702, %v698
    %v955 = vpack.c.b16 %v703, %v699
    %v956 = vpack.c.b16 %v704, %v700
    %v957 = vpack.c.b16 %v705, %v701
    %v958 = vpack.c.b16 %v710, %v706
    %v959 = vpack.c.b16 %v711, %v707
    %v960 = vpack.c.b16 %v712, %v708
    %v961 = vpack.c.b16 %v713, %v709
    %v962 = vpack.c.b16 %v718, %v714
    %v963 = vpack.c.b16 %v719, %v715
    %v964 = vpack.c.b16 %v720, %v716
    %v965 = vpack.c.b16 %v721, %v717
    %v966 = vpack.c.b16 %v726, %v722
    %v967 = vpack.c.b16 %v727, %v723
    %v968 = vpack.c.b16 %v728, %v724
    %v969 = vpack.c.b16 %v729, %v725
    %v970 = vpack.c.b16 %v734, %v730
    %v971 = vpack.c.b16 %v735, %v731
    %v972 = vpack.c.b16 %v736, %v732
    %v973 = vpack.c.b16 %v737, %v733
    %v974 = vpack.c.b16 %v742, %v738
    %v975 = vpack.c.b16 %v743, %v739
    %v976 = vpack.c.b16 %v744, %v740
    %v977 = vpack.c.b16 %v745, %v741
    %v978 = vpack.c.b16 %v750, %v746
    %v979 = vpack.c.b16 %v751, %v747
    %v980 = vpack.c.b16 %v752, %v748
    %v981 = vpack.c.b16 %v753, %v749
    %v982 = vpack.c.b16 %v758, %v754
    %v983 = vpack.c.b16 %v759, %v755
    %v984 = vpack.c.b16 %v760, %v756
    %v985 = vpack.c.b16 %v761, %v757
    %v986 = vpack.c.b16 %v766, %v762
    %v987 = vpack.c.b16 %v767, %v763
    %v988 = vpack.c.b16 %v768, %v764
    %v989 = vpack.c.b16 %v769, %v765
    %v990 = vpack.c.b16 %v774, %v770
    %v991 = vpack.c.b16 %v775, %v771
    %v992 = vpack.c.b16 %v776, %v772
    %v993 = vpack.c.b16 %v777, %v773
    %v994 = vpack.c.b16 %v782, %v778
    %v995 = vpack.c.b16 %v783, %v779
    %v996 = vpack.c.b16 %v784, %v780
    %v997 = vpack.c.b16 %v785, %v781
    %v998 = vpack.c.b16 %v790, %v786
    %v999 = vpack.c.b16 %v791, %v787
    %v1000 = vpack.c.b16 %v792, %v788
    %v1001 = vpack.c.b16 %v793, %v789
    %v1002 = vpack.c.b16 %v798, %v794
    %v1003 = vpack.c.b16 %v799, %v795
    %v1004 = vpack.c.b16 %v800, %v796
    %v1005 = vpack.c.b16 %v801, %v797
    %v1006 = vpack.c.b16 %v806, %v802
    %v1007 = vpack.c.b16 %v807, %v803
    %v1008 = vpack.c.b16 %v808, %v804
    %v1009 = vpack.c.b16 %v809, %v805
    %v1010 = vpack.c.b16 %v814, %v810
    %v1011 = vpack.c.b16 %v815, %v811
    %v1012 = vpack.c.b16 %v816, %v812
    %v1013 = vpack.c.b16 %v817, %v813
    %v1014 = vpack.c.b16 %v822, %v818
    %v1015 = vpack.c.b16 %v823, %v819
    %v1016 = vpack.c.b16 %v824, %v820
    %v1017 = vpack.c.b16 %v825, %v821
    %v1018 = vpack.c.b16 %v830, %v826
    %v1019 = vpack.c.b16 %v831, %v827
    %v1020 = vpack.c.b16 %v832, %v828
    %v1021 = vpack.c.b16 %v833, %v829
    %v1022 = vpack.c.b16 %v838, %v834
    %v1023 = vpack.c.b16 %v839, %v835
    %v1024 = vpack.c.b16 %v840, %v836
    %v1025 = vpack.c.b16 %v841, %v837
    %v1026 = vpack.c.b16 %v846, %v842
    %v1027 = vpack.c.b16 %v847, %v843
    %v1028 = vpack.c.b16 %v848, %v844
    %v1029 = vpack.c.b16 %v849, %v845
    %v1030 = vpack.c.b16 %v854, %v850
    %v1031 = vpack.c.b16 %v855, %v851
    %v1032 = vpack.c.b16 %v856, %v852
    %v1033 = vpack.c.b16 %v857, %v853
    %v1034 = vpack.c.b16 %v862, %v858
    %v1035 = vpack.c.b16 %v863, %v859
    %v1036 = vpack.c.b16 %v864, %v860
    %v1037 = vpack.c.b16 %v865, %v861
    %v1038 = vpack.c.b16 %v870, %v866
    %v1039 = vpack.c.b16 %v871, %v867
    %v1040 = vpack.c.b16 %v872, %v868
    %v1041 = vpack.c.b16 %v873, %v869
    %v1042 = vpack.c.b16 %v878, %v874
    %v1043 = vpack.c.b16 %v879, %v875
    %v1044 = vpack.c.b16 %v880, %v876
    %v1045 = vpack.c.b16 %v881, %v877
    %v1046 = vpack.c.b16 %v886, %v882
    %v1047 = vpack.c.b16 %v887, %v883
    %v1048 = vpack.c.b16 %v888, %v884
    %v1049 = vpack.c.b16 %v889, %v885
    %v1050 = vpack.c.b16 %v894, %v890
    %v1051 = vpack.c.b16 %v895, %v891
    %v1052 = vpack.c.b16 %v896, %v892
    %v1053 = vpack.c.b16 %v897, %v893
    %v1054 = vpack.c.b16 %v902, %v898
    %v1055 = vpack.c.b16 %v903, %v899
    %v1056 = vpack.c.b16 %v904, %v900
    %v1057 = vpack.c.b16 %v905, %v901
    %v1058 = vpack.c.b16 %v910, %v906
    %v1059 = vpack.c.b16 %v911, %v907
    %v1060 = vpack.c.b16 %v912, %v908
    %v1061 = vpack.c.b16 %v913, %v909
    %v1062 = vpack.c.b16 %v918, %v914
    %v1063 = vpack.c.b16 %v919, %v915
    %v1064 = vpack.c.b16 %v920, %v916
    %v1065 = vpack.c.b16 %v921, %v917
    %v1066 = vpack.c.b16 %v926, %v922
    %v1067 = vpack.c.b16 %v927, %v923
    %v1068 = vpack.c.b16 %v928, %v924
    %v1069 = vpack.c.b16 %v929, %v925
    %v1070 = vpack.c.b16 %v934, %v930
    %v1071 = vpack.c.b16 %v935, %v931
    %v1072 = vpack.c.b16 %v936, %v932
    %v1073 = vpack.c.b16 %v937, %v933
    %v1074 = vpack.c.b16 %v942, %v938
    %v1075 = vpack.c.b16 %v943, %v939
    %v1076 = vpack.c.b16 %v944, %v940
    %v1077 = vpack.c.b16 %v945, %v941
    %v1078 = vpack.c.b16 %v950, %v946
    %v1079 = vpack.c.b16 %v951, %v947
    %v1080 = vpack.c.b16 %v952, %v948
    %v1081 = vpack.c.b16 %v953, %v949
    %1210 = vmatprep.subr.bf16.mxu0 %v955
    %1211 = vmatpush1.bf16.msra.mxu0 %v954
    %1212 = vmatprep.subr.bf16.mxu0 %v959
    %1213 = vmatpush1.bf16.msra.mxu0 %v958
    %1214 = vmatprep.subr.bf16.mxu0 %v963
    %1215 = vmatpush1.bf16.msra.mxu0 %v962
    %1216 = vmatprep.subr.bf16.mxu0 %v967
    %1217 = vmatpush1.bf16.msra.mxu0 %v966
    %1218 = vmatprep.subr.bf16.mxu0 %v971
    %1219 = vmatpush1.bf16.msra.mxu0 %v970
    %1220 = vmatprep.subr.bf16.mxu0 %v975
    %1221 = vmatpush1.bf16.msra.mxu0 %v974
    %1222 = vmatprep.subr.bf16.mxu0 %v979
    %1223 = vmatpush1.bf16.msra.mxu0 %v978
    %1224 = vmatprep.subr.bf16.mxu0 %v983
    %1225 = vmatpush1.bf16.msra.mxu0 %v982
    %1226 = vmatprep.subr.bf16.mxu0 %v987
    %1227 = vmatpush1.bf16.msra.mxu0 %v986
    %1228 = vmatprep.subr.bf16.mxu0 %v991
    %1229 = vmatpush1.bf16.msra.mxu0 %v990
    %1230 = vmatprep.subr.bf16.mxu0 %v995
    %1231 = vmatpush1.bf16.msra.mxu0 %v994
    %1232 = vmatprep.subr.bf16.mxu0 %v999
    %1233 = vmatpush1.bf16.msra.mxu0 %v998
    %1234 = vmatprep.subr.bf16.mxu0 %v1003
    %1235 = vmatpush1.bf16.msra.mxu0 %v1002
    %1236 = vmatprep.subr.bf16.mxu0 %v1007
    %1237 = vmatpush1.bf16.msra.mxu0 %v1006
    %1238 = vmatprep.subr.bf16.mxu0 %v1011
    %1239 = vmatpush1.bf16.msra.mxu0 %v1010
    %1240 = vmatprep.subr.bf16.mxu0 %v1015
    %1241 = vmatpush1.bf16.msra.mxu0 %v1014
    %1242 = vmatprep.mubr.bf16.mxu0 %v417
    %1243 = vmatmul.mubr.bf16.gmra.mrb[0].mxu0 %v416
    %v1244 = vpop.f32.mrb[0].mxu0
    %v1245 = vadd.f32 %v553, %v1244
    %v1246 = vpop.f32.mrb[0].mxu0
    %v1247 = vadd.f32 %v557, %v1246
    %v1248 = vpop.f32.mrb[0].mxu0
    %v1249 = vpop.f32.mrb[0].mxu0
    %1250 = vdwg.mxu0
    %1251 = vmatprep.subr.bf16.mxu0 %v1019
    %1252 = vmatpush1.bf16.msra.mxu0 %v1018
    %1253 = vmatprep.subr.bf16.mxu0 %v1023
    %1254 = vmatpush1.bf16.msra.mxu0 %v1022
    %1255 = vmatprep.subr.bf16.mxu0 %v1027
    %1256 = vmatpush1.bf16.msra.mxu0 %v1026
    %1257 = vmatprep.subr.bf16.mxu0 %v1031
    %1258 = vmatpush1.bf16.msra.mxu0 %v1030
    %1259 = vmatprep.subr.bf16.mxu0 %v1035
    %1260 = vmatpush1.bf16.msra.mxu0 %v1034
    %1261 = vmatprep.subr.bf16.mxu0 %v1039
    %1262 = vmatpush1.bf16.msra.mxu0 %v1038
    %1263 = vmatprep.subr.bf16.mxu0 %v1043
    %1264 = vmatpush1.bf16.msra.mxu0 %v1042
    %1265 = vmatprep.subr.bf16.mxu0 %v1047
    %1266 = vmatpush1.bf16.msra.mxu0 %v1046
    %1267 = vmatprep.subr.bf16.mxu0 %v1051
    %1268 = vmatpush1.bf16.msra.mxu0 %v1050
    %1269 = vmatprep.subr.bf16.mxu0 %v1055
    %1270 = vmatpush1.bf16.msra.mxu0 %v1054
    %1271 = vmatprep.subr.bf16.mxu0 %v1059
    %1272 = vmatpush1.bf16.msra.mxu0 %v1058
    %1273 = vmatprep.subr.bf16.mxu0 %v1063
    %1274 = vmatpush1.bf16.msra.mxu0 %v1062
    %1275 = vmatprep.subr.bf16.mxu0 %v1067
    %1276 = vmatpush1.bf16.msra.mxu0 %v1066
    %1277 = vmatprep.subr.bf16.mxu0 %v1071
    %1278 = vmatpush1.bf16.msra.mxu0 %v1070
    %1279 = vmatprep.subr.bf16.mxu0 %v1075
    %1280 = vmatpush1.bf16.msra.mxu0 %v1074
    %1281 = vmatprep.subr.bf16.mxu0 %v1079
    %1282 = vmatpush1.bf16.msra.mxu0 %v1078
    %1283 = vmatprep.mubr.bf16.mxu0 %v419
    %1284 = vmatmul.mubr.bf16.gmra.mrb[0].mxu0 %v418
    %v1285 = vpop.f32.mrb[0].mxu0
    %v1286 = vadd.f32 %v1245, %v1285
    %v1287 = vpop.f32.mrb[0].mxu0
    %v1288 = vadd.f32 %v1247, %v1287
    %v1289 = vpop.f32.mrb[0].mxu0
    %v1290 = vpop.f32.mrb[0].mxu0
    %1291 = vdwg.mxu0
    %1292 = vmatprep.subr.bf16.mxu0 %v957
    %1293 = vmatpush1.bf16.msra.mxu0 %v956
    %1294 = vmatprep.subr.bf16.mxu0 %v961
    %1295 = vmatpush1.bf16.msra.mxu0 %v960
    %1296 = vmatprep.subr.bf16.mxu0 %v965
    %1297 = vmatpush1.bf16.msra.mxu0 %v964
    %1298 = vmatprep.subr.bf16.mxu0 %v969
    %1299 = vmatpush1.bf16.msra.mxu0 %v968
    %1300 = vmatprep.subr.bf16.mxu0 %v973
    %1301 = vmatpush1.bf16.msra.mxu0 %v972
    %1302 = vmatprep.subr.bf16.mxu0 %v977
    %1303 = vmatpush1.bf16.msra.mxu0 %v976
    %1304 = vmatprep.subr.bf16.mxu0 %v981
    %1305 = vmatpush1.bf16.msra.mxu0 %v980
    %1306 = vmatprep.subr.bf16.mxu0 %v985
    %1307 = vmatpush1.bf16.msra.mxu0 %v984
    %1308 = vmatprep.subr.bf16.mxu0 %v989
    %1309 = vmatpush1.bf16.msra.mxu0 %v988
    %1310 = vmatprep.subr.bf16.mxu0 %v993
    %1311 = vmatpush1.bf16.msra.mxu0 %v992
    %1312 = vmatprep.subr.bf16.mxu0 %v997
    %1313 = vmatpush1.bf16.msra.mxu0 %v996
    %1314 = vmatprep.subr.bf16.mxu0 %v1001
    %1315 = vmatpush1.bf16.msra.mxu0 %v1000
    %1316 = vmatprep.subr.bf16.mxu0 %v1005
    %1317 = vmatpush1.bf16.msra.mxu0 %v1004
    %1318 = vmatprep.subr.bf16.mxu0 %v1009
    %1319 = vmatpush1.bf16.msra.mxu0 %v1008
    %1320 = vmatprep.subr.bf16.mxu0 %v1013
    %1321 = vmatpush1.bf16.msra.mxu0 %v1012
    %1322 = vmatprep.subr.bf16.mxu0 %v1017
    %1323 = vmatpush1.bf16.msra.mxu0 %v1016
    %1324 = vmatprep.mubr.bf16.mxu0 %v417
    %1325 = vmatmul.mubr.bf16.gmra.mrb[0].mxu0 %v416
    %v1326 = vpop.f32.mrb[0].mxu0
    %v1327 = vadd.f32 %v561, %v1326
    %v1328 = vpop.f32.mrb[0].mxu0
    %v1329 = vadd.f32 %v565, %v1328
    %v1330 = vpop.f32.mrb[0].mxu0
    %v1331 = vpop.f32.mrb[0].mxu0
    %1332 = vdwg.mxu0
    %1333 = vmatprep.subr.bf16.mxu0 %v1021
    %1334 = vmatpush1.bf16.msra.mxu0 %v1020
    %1335 = vmatprep.subr.bf16.mxu0 %v1025
    %1336 = vmatpush1.bf16.msra.mxu0 %v1024
    %1337 = vmatprep.subr.bf16.mxu0 %v1029
    %1338 = vmatpush1.bf16.msra.mxu0 %v1028
    %1339 = vmatprep.subr.bf16.mxu0 %v1033
    %1340 = vmatpush1.bf16.msra.mxu0 %v1032
    %1341 = vmatprep.subr.bf16.mxu0 %v1037
    %1342 = vmatpush1.bf16.msra.mxu0 %v1036
    %1343 = vmatprep.subr.bf16.mxu0 %v1041
    %1344 = vmatpush1.bf16.msra.mxu0 %v1040
    %1345 = vmatprep.subr.bf16.mxu0 %v1045
    %1346 = vmatpush1.bf16.msra.mxu0 %v1044
    %1347 = vmatprep.subr.bf16.mxu0 %v1049
    %1348 = vmatpush1.bf16.msra.mxu0 %v1048
    %1349 = vmatprep.subr.bf16.mxu0 %v1053
    %1350 = vmatpush1.bf16.msra.mxu0 %v1052
    %1351 = vmatprep.subr.bf16.mxu0 %v1057
    %1352 = vmatpush1.bf16.msra.mxu0 %v1056
    %1353 = vmatprep.subr.bf16.mxu0 %v1061
    %1354 = vmatpush1.bf16.msra.mxu0 %v1060
    %1355 = vmatprep.subr.bf16.mxu0 %v1065
    %1356 = vmatpush1.bf16.msra.mxu0 %v1064
    %1357 = vmatprep.subr.bf16.mxu0 %v1069
    %1358 = vmatpush1.bf16.msra.mxu0 %v1068
    %1359 = vmatprep.subr.bf16.mxu0 %v1073
    %1360 = vmatpush1.bf16.msra.mxu0 %v1072
    %1361 = vmatprep.subr.bf16.mxu0 %v1077
    %1362 = vmatpush1.bf16.msra.mxu0 %v1076
    %1363 = vmatprep.subr.bf16.mxu0 %v1081
    %1364 = vmatpush1.bf16.msra.mxu0 %v1080
    %1365 = vmatprep.mubr.bf16.mxu0 %v419
    %1366 = vmatmul.mubr.bf16.gmra.mrb[0].mxu0 %v418
    %v1367 = vpop.f32.mrb[0].mxu0
    %v1368 = vadd.f32 %v1327, %v1367
    %v1369 = vpop.f32.mrb[0].mxu0
    %v1370 = vadd.f32 %v1329, %v1369
    %v1371 = vpop.f32.mrb[0].mxu0
    %v1372 = vpop.f32.mrb[0].mxu0
    %1373 = vdwg.mxu0
    %v1374 = vmax.f32 %v1286, 0.0
    %v1375 = vmax.f32 %v1288, 0.0
    %v1376 = vmax.f32 %v1368, 0.0
    %v1377 = vmax.f32 %v1370, 0.0
    %v1378 = vpack.c.bf16 %v1374, %v1374
    %v1379 = vpack.c.bf16 %v1375, %v1375
    %v1380 = vpack.c.bf16 %v1376, %v1376
    %v1381 = vpack.c.bf16 %v1377, %v1377
    %v1382 = vld [vmem:[#allocation11] sm:$0xf]
    %v1383 = vld [vmem:[#allocation11 + $0x4] sm:$0xf]
    %v1384 = vld [vmem:[#allocation11 + $0x8] sm:$0xf]
    %v1385 = vld [vmem:[#allocation11 + $0xc] sm:$0xf]
    %v1386 = vld [vmem:[#allocation11 + $0x10] sm:$0xf]
    %v1387 = vld [vmem:[#allocation11 + $0x14] sm:$0xf]
    %v1388 = vld [vmem:[#allocation11 + $0x18] sm:$0xf]
    %v1389 = vld [vmem:[#allocation11 + $0x1c] sm:$0xf]
    %v1390 = vld [vmem:[#allocation11 + $0x20] sm:$0xf]
    %v1391 = vld [vmem:[#allocation11 + $0x24] sm:$0xf]
    %v1392 = vld [vmem:[#allocation11 + $0x28] sm:$0xf]
    %v1393 = vld [vmem:[#allocation11 + $0x2c] sm:$0xf]
    %v1394 = vld [vmem:[#allocation11 + $0x30] sm:$0xf]
    %v1395 = vld [vmem:[#allocation11 + $0x34] sm:$0xf]
    %v1396 = vld [vmem:[#allocation11 + $0x38] sm:$0xf]
    %v1397 = vld [vmem:[#allocation11 + $0x3c] sm:$0xf]
    %v1398 = vld [vmem:[#allocation11 + $0x40] sm:$0xf]
    %v1399 = vld [vmem:[#allocation11 + $0x44] sm:$0xf]
    %v1400 = vld [vmem:[#allocation11 + $0x48] sm:$0xf]
    %v1401 = vld [vmem:[#allocation11 + $0x4c] sm:$0xf]
    %v1402 = vld [vmem:[#allocation11 + $0x50] sm:$0xf]
    %v1403 = vld [vmem:[#allocation11 + $0x54] sm:$0xf]
    %v1404 = vld [vmem:[#allocation11 + $0x58] sm:$0xf]
    %v1405 = vld [vmem:[#allocation11 + $0x5c] sm:$0xf]
    %v1406 = vld [vmem:[#allocation11 + $0x60] sm:$0xf]
    %v1407 = vld [vmem:[#allocation11 + $0x64] sm:$0xf]
    %v1408 = vld [vmem:[#allocation11 + $0x68] sm:$0xf]
    %v1409 = vld [vmem:[#allocation11 + $0x6c] sm:$0xf]
    %v1410 = vld [vmem:[#allocation11 + $0x70] sm:$0xf]
    %v1411 = vld [vmem:[#allocation11 + $0x74] sm:$0xf]
    %v1412 = vld [vmem:[#allocation11 + $0x78] sm:$0xf]
    %v1413 = vld [vmem:[#allocation11 + $0x7c] sm:$0xf]
    %v1414 = vld [vmem:[#allocation11 + $0x80] sm:$0xf]
    %v1415 = vld [vmem:[#allocation11 + $0x84] sm:$0xf]
    %v1416 = vld [vmem:[#allocation11 + $0x88] sm:$0xf]
    %v1417 = vld [vmem:[#allocation11 + $0x8c] sm:$0xf]
    %v1418 = vld [vmem:[#allocation11 + $0x90] sm:$0xf]
    %v1419 = vld [vmem:[#allocation11 + $0x94] sm:$0xf]
    %v1420 = vld [vmem:[#allocation11 + $0x98] sm:$0xf]
    %v1421 = vld [vmem:[#allocation11 + $0x9c] sm:$0xf]
    %v1422 = vld [vmem:[#allocation11 + $0xa0] sm:$0xf]
    %v1423 = vld [vmem:[#allocation11 + $0xa4] sm:$0xf]
    %v1424 = vld [vmem:[#allocation11 + $0xa8] sm:$0xf]
    %v1425 = vld [vmem:[#allocation11 + $0xac] sm:$0xf]
    %v1426 = vld [vmem:[#allocation11 + $0xb0] sm:$0xf]
    %v1427 = vld [vmem:[#allocation11 + $0xb4] sm:$0xf]
    %v1428 = vld [vmem:[#allocation11 + $0xb8] sm:$0xf]
    %v1429 = vld [vmem:[#allocation11 + $0xbc] sm:$0xf]
    %v1430 = vld [vmem:[#allocation11 + $0xc0] sm:$0xf]
    %v1431 = vld [vmem:[#allocation11 + $0xc4] sm:$0xf]
    %v1432 = vld [vmem:[#allocation11 + $0xc8] sm:$0xf]
    %v1433 = vld [vmem:[#allocation11 + $0xcc] sm:$0xf]
    %v1434 = vld [vmem:[#allocation11 + $0xd0] sm:$0xf]
    %v1435 = vld [vmem:[#allocation11 + $0xd4] sm:$0xf]
    %v1436 = vld [vmem:[#allocation11 + $0xd8] sm:$0xf]
    %v1437 = vld [vmem:[#allocation11 + $0xdc] sm:$0xf]
    %v1438 = vld [vmem:[#allocation11 + $0xe0] sm:$0xf]
    %v1439 = vld [vmem:[#allocation11 + $0xe4] sm:$0xf]
    %v1440 = vld [vmem:[#allocation11 + $0xe8] sm:$0xf]
    %v1441 = vld [vmem:[#allocation11 + $0xec] sm:$0xf]
    %v1442 = vld [vmem:[#allocation11 + $0xf0] sm:$0xf]
    %v1443 = vld [vmem:[#allocation11 + $0xf4] sm:$0xf]
    %v1444 = vld [vmem:[#allocation11 + $0xf8] sm:$0xf]
    %v1445 = vld [vmem:[#allocation11 + $0xfc] sm:$0xf]
    %v1446 = vld [vmem:[#allocation13] sm:$0x1]
    %v1448 = vlaneseq
    %v1449 = vshrl.u32 %v1448, 7
    %v1450 = vsub.s32 0, %v1449
    %v1451 = vrot.slane %v1446, %v1450
    %v1517 = vunpack.c.l.b16 %v1382
    %v1518 = vunpack.c.l.b16 %v1383
    %v1519 = vunpack.c.l.b16 %v1384
    %v1520 = vunpack.c.l.b16 %v1385
    %v1521 = vunpack.c.l.b16 %v1386
    %v1522 = vunpack.c.l.b16 %v1387
    %v1523 = vunpack.c.l.b16 %v1388
    %v1524 = vunpack.c.l.b16 %v1389
    %v1525 = vunpack.c.l.b16 %v1390
    %v1526 = vunpack.c.l.b16 %v1391
    %v1527 = vunpack.c.l.b16 %v1392
    %v1528 = vunpack.c.l.b16 %v1393
    %v1529 = vunpack.c.l.b16 %v1394
    %v1530 = vunpack.c.l.b16 %v1395
    %v1531 = vunpack.c.l.b16 %v1396
    %v1532 = vunpack.c.l.b16 %v1397
    %v1533 = vunpack.c.l.b16 %v1398
    %v1534 = vunpack.c.l.b16 %v1399
    %v1535 = vunpack.c.l.b16 %v1400
    %v1536 = vunpack.c.l.b16 %v1401
    %v1537 = vunpack.c.l.b16 %v1402
    %v1538 = vunpack.c.l.b16 %v1403
    %v1539 = vunpack.c.l.b16 %v1404
    %v1540 = vunpack.c.l.b16 %v1405
    %v1541 = vunpack.c.l.b16 %v1406
    %v1542 = vunpack.c.l.b16 %v1407
    %v1543 = vunpack.c.l.b16 %v1408
    %v1544 = vunpack.c.l.b16 %v1409
    %v1545 = vunpack.c.l.b16 %v1410
    %v1546 = vunpack.c.l.b16 %v1411
    %v1547 = vunpack.c.l.b16 %v1412
    %v1548 = vunpack.c.l.b16 %v1413
    %v1549 = vunpack.c.l.b16 %v1414
    %v1550 = vunpack.c.l.b16 %v1415
    %v1551 = vunpack.c.l.b16 %v1416
    %v1552 = vunpack.c.l.b16 %v1417
    %v1553 = vunpack.c.l.b16 %v1418
    %v1554 = vunpack.c.l.b16 %v1419
    %v1555 = vunpack.c.l.b16 %v1420
    %v1556 = vunpack.c.l.b16 %v1421
    %v1557 = vunpack.c.l.b16 %v1422
    %v1558 = vunpack.c.l.b16 %v1423
    %v1559 = vunpack.c.l.b16 %v1424
    %v1560 = vunpack.c.l.b16 %v1425
    %v1561 = vunpack.c.l.b16 %v1426
    %v1562 = vunpack.c.l.b16 %v1427
    %v1563 = vunpack.c.l.b16 %v1428
    %v1564 = vunpack.c.l.b16 %v1429
    %v1565 = vunpack.c.l.b16 %v1430
    %v1566 = vunpack.c.l.b16 %v1431
    %v1567 = vunpack.c.l.b16 %v1432
    %v1568 = vunpack.c.l.b16 %v1433
    %v1569 = vunpack.c.l.b16 %v1434
    %v1570 = vunpack.c.l.b16 %v1435
    %v1571 = vunpack.c.l.b16 %v1436
    %v1572 = vunpack.c.l.b16 %v1437
    %v1573 = vunpack.c.l.b16 %v1438
    %v1574 = vunpack.c.l.b16 %v1439
    %v1575 = vunpack.c.l.b16 %v1440
    %v1576 = vunpack.c.l.b16 %v1441
    %v1577 = vunpack.c.l.b16 %v1442
    %v1578 = vunpack.c.l.b16 %v1443
    %v1579 = vunpack.c.l.b16 %v1444
    %v1580 = vunpack.c.l.b16 %v1445
    %v1581 = vpack.c.b16 %v1518, %v1517
    %v1582 = vpack.c.b16 %v1520, %v1519
    %v1583 = vpack.c.b16 %v1522, %v1521
    %v1584 = vpack.c.b16 %v1524, %v1523
    %v1585 = vpack.c.b16 %v1526, %v1525
    %v1586 = vpack.c.b16 %v1528, %v1527
    %v1587 = vpack.c.b16 %v1530, %v1529
    %v1588 = vpack.c.b16 %v1532, %v1531
    %v1589 = vpack.c.b16 %v1534, %v1533
    %v1590 = vpack.c.b16 %v1536, %v1535
    %v1591 = vpack.c.b16 %v1538, %v1537
    %v1592 = vpack.c.b16 %v1540, %v1539
    %v1593 = vpack.c.b16 %v1542, %v1541
    %v1594 = vpack.c.b16 %v1544, %v1543
    %v1595 = vpack.c.b16 %v1546, %v1545
    %v1596 = vpack.c.b16 %v1548, %v1547
    %v1597 = vpack.c.b16 %v1550, %v1549
    %v1598 = vpack.c.b16 %v1552, %v1551
    %v1599 = vpack.c.b16 %v1554, %v1553
    %v1600 = vpack.c.b16 %v1556, %v1555
    %v1601 = vpack.c.b16 %v1558, %v1557
    %v1602 = vpack.c.b16 %v1560, %v1559
    %v1603 = vpack.c.b16 %v1562, %v1561
    %v1604 = vpack.c.b16 %v1564, %v1563
    %v1605 = vpack.c.b16 %v1566, %v1565
    %v1606 = vpack.c.b16 %v1568, %v1567
    %v1607 = vpack.c.b16 %v1570, %v1569
    %v1608 = vpack.c.b16 %v1572, %v1571
    %v1609 = vpack.c.b16 %v1574, %v1573
    %v1610 = vpack.c.b16 %v1576, %v1575
    %v1611 = vpack.c.b16 %v1578, %v1577
    %v1612 = vpack.c.b16 %v1580, %v1579
    %1645 = vmatprep.subr.bf16.mxu0 0
    %1646 = vmatpush1.bf16.msra.mxu0 %v1581
    %1647 = vmatprep.subr.bf16.mxu0 0
    %1648 = vmatpush1.bf16.msra.mxu0 %v1582
    %1649 = vmatprep.subr.bf16.mxu0 0
    %1650 = vmatpush1.bf16.msra.mxu0 %v1583
    %1651 = vmatprep.subr.bf16.mxu0 0
    %1652 = vmatpush1.bf16.msra.mxu0 %v1584
    %1653 = vmatprep.subr.bf16.mxu0 0
    %1654 = vmatpush1.bf16.msra.mxu0 %v1585
    %1655 = vmatprep.subr.bf16.mxu0 0
    %1656 = vmatpush1.bf16.msra.mxu0 %v1586
    %1657 = vmatprep.subr.bf16.mxu0 0
    %1658 = vmatpush1.bf16.msra.mxu0 %v1587
    %1659 = vmatprep.subr.bf16.mxu0 0
    %1660 = vmatpush1.bf16.msra.mxu0 %v1588
    %1661 = vmatprep.subr.bf16.mxu0 0
    %1662 = vmatpush1.bf16.msra.mxu0 %v1589
    %1663 = vmatprep.subr.bf16.mxu0 0
    %1664 = vmatpush1.bf16.msra.mxu0 %v1590
    %1665 = vmatprep.subr.bf16.mxu0 0
    %1666 = vmatpush1.bf16.msra.mxu0 %v1591
    %1667 = vmatprep.subr.bf16.mxu0 0
    %1668 = vmatpush1.bf16.msra.mxu0 %v1592
    %1669 = vmatprep.subr.bf16.mxu0 0
    %1670 = vmatpush1.bf16.msra.mxu0 %v1593
    %1671 = vmatprep.subr.bf16.mxu0 0
    %1672 = vmatpush1.bf16.msra.mxu0 %v1594
    %1673 = vmatprep.subr.bf16.mxu0 0
    %1674 = vmatpush1.bf16.msra.mxu0 %v1595
    %1675 = vmatprep.subr.bf16.mxu0 0
    %1676 = vmatpush1.bf16.msra.mxu0 %v1596
    %1677 = vmatprep.mubr.bf16.mxu0 %v1379
    %1678 = vmatmul.mubr.bf16.gmra.mrb[0].mxu0 %v1378
    %v1679 = vpop.f32.mrb[0].mxu0
    %v1680 = vadd.f32 %v1451, %v1679
    %v1681 = vpop.f32.mrb[0].mxu0
    %v1682 = vpop.f32.mrb[0].mxu0
    %v1683 = vpop.f32.mrb[0].mxu0
    %1684 = vdwg.mxu0
    %1685 = vmatprep.subr.bf16.mxu0 0
    %1686 = vmatpush1.bf16.msra.mxu0 %v1597
    %1687 = vmatprep.subr.bf16.mxu0 0
    %1688 = vmatpush1.bf16.msra.mxu0 %v1598
    %1689 = vmatprep.subr.bf16.mxu0 0
    %1690 = vmatpush1.bf16.msra.mxu0 %v1599
    %1691 = vmatprep.subr.bf16.mxu0 0
    %1692 = vmatpush1.bf16.msra.mxu0 %v1600
    %1693 = vmatprep.subr.bf16.mxu0 0
    %1694 = vmatpush1.bf16.msra.mxu0 %v1601
    %1695 = vmatprep.subr.bf16.mxu0 0
    %1696 = vmatpush1.bf16.msra.mxu0 %v1602
    %1697 = vmatprep.subr.bf16.mxu0 0
    %1698 = vmatpush1.bf16.msra.mxu0 %v1603
    %1699 = vmatprep.subr.bf16.mxu0 0
    %1700 = vmatpush1.bf16.msra.mxu0 %v1604
    %1701 = vmatprep.subr.bf16.mxu0 0
    %1702 = vmatpush1.bf16.msra.mxu0 %v1605
    %1703 = vmatprep.subr.bf16.mxu0 0
    %1704 = vmatpush1.bf16.msra.mxu0 %v1606
    %1705 = vmatprep.subr.bf16.mxu0 0
    %1706 = vmatpush1.bf16.msra.mxu0 %v1607
    %1707 = vmatprep.subr.bf16.mxu0 0
    %1708 = vmatpush1.bf16.msra.mxu0 %v1608
    %1709 = vmatprep.subr.bf16.mxu0 0
    %1710 = vmatpush1.bf16.msra.mxu0 %v1609
    %1711 = vmatprep.subr.bf16.mxu0 0
    %1712 = vmatpush1.bf16.msra.mxu0 %v1610
    %1713 = vmatprep.subr.bf16.mxu0 0
    %1714 = vmatpush1.bf16.msra.mxu0 %v1611
    %1715 = vmatprep.subr.bf16.mxu0 0
    %1716 = vmatpush1.bf16.msra.mxu0 %v1612
    %1717 = vmatprep.mubr.bf16.mxu0 %v1381
    %1718 = vmatmul.mubr.bf16.gmra.mrb[0].mxu0 %v1380
    %v1719 = vpop.f32.mrb[0].mxu0
    %v1720 = vadd.f32 %v1680, %v1719
    %v1721 = vpop.f32.mrb[0].mxu0
    %v1722 = vpop.f32.mrb[0].mxu0
    %v1723 = vpop.f32.mrb[0].mxu0
    %1724 = vdwg.mxu0
    %1725 = vst [vmem:[#allocation14] sm:$0xff] %v1720
    // Predicated region
    $region58: #{_enc_forward.1} parent=1 // pred_check
      _
    $region59: #{_enc_forward.1} parent=1 // pred_check_branch
      %1727 = sbr.rel (0) target = $region61
    $region60: #{_enc_forward.1} parent=1 // pred_region
      %s1729 = ssub.s32 128, 128
      %1730 = vsyncadd [#allocation4], %s1729
      %s1732 = sshll.u32 [#allocation14], 4
      %s1733 = int_to_ptr.vmem [resolvable:$true] %s1732
      %1735 = dma.vmem_to_hbm [thread:$0]  %s1733, 128, %s7, [#allocation4]
    $region61: #{_enc_forward.1} parent=1 // pred_fallthru
      _
    // Predicated region
    $region62: #{_enc_forward.1} parent=1 // pred_check
      _
    $region63: #{_enc_forward.1} parent=1 // pred_check_branch
      %1737 = sbr.rel (0) target = $region65
    $region64: #{_enc_forward.1} parent=1 // pred_region
      %1738 = dma.done [#allocation4], 128
    $region65: #{_enc_forward.1} parent=1 // pred_fallthru
      _
    %1739 = vsyncpa [#allocation3], 1
    %1740 = vsyncpa [#allocation6], 1
    %1741 = vsyncpa [#allocation9], 1
    %1742 = vsyncpa [#allocation12], 1
    %1743 = vsyncpa [#allocation4], 1

</llo_original>
